<compile_context>
chip_gen: v7x
topology: tpu7x:2x2x1
jax: 0.10.0
libtpu: 0.0.40
codegen_flags: <defaults>
</compile_context>

<pallas_src>
import functools
import math
from types import SimpleNamespace

import jax
import jax.numpy as jnp
from jax import lax
from jax.experimental import pallas as pl
from jax.experimental.pallas import tpu as pltpu


def _round_up(x, m):
    return -(-x // m) * m


# ----------------------------------------------------------------------------
# Fused Pallas kernel: entire GST_AE forward
# ----------------------------------------------------------------------------
def _gst_ae_fused_kernel(adj_ref, x_ref, p_ref, out_ref, *, n, nf, nhid, k):
    f32 = jnp.float32

    # ---- GCN normalization folded in-kernel:  A_norm = D^-1/2 (A + I) D^-1/2 ----
    adj = adj_ref[...]                                            # (n, n), no self-loops
    rows = lax.broadcasted_iota(jnp.int32, (n, n), 0)
    cols = lax.broadcasted_iota(jnp.int32, (n, n), 1)
    a_hat = adj + (rows == cols).astype(f32)                      # add self-loops
    deg_r = jnp.sum(a_hat, axis=1, keepdims=True)                 # (n, 1) XLU lane reduce
    deg_c = jnp.sum(a_hat, axis=0, keepdims=True)                 # (1, n) XLU sublane reduce
    dr = jnp.where(deg_r > 0, lax.rsqrt(deg_r), 0.0)              # EUP
    dc = jnp.where(deg_c > 0, lax.rsqrt(deg_c), 0.0)
    # row/col degrees coincide for the symmetric adjacencies GCNConv operates on
    a_norm = a_hat * dr * dc

    # ---- unpack the parameter slab (static Ref slices) ----
    w2 = p_ref[0:nhid, 0:nhid]
    w3 = p_ref[0:nhid, nhid:2 * nhid]
    w4 = p_ref[0:nhid, 2 * nhid:3 * nhid]
    w5 = p_ref[0:nhid, 3 * nhid:3 * nhid + nf]
    w1 = p_ref[nhid:nhid + nf, 0:nhid]
    seeds = p_ref[nhid:nhid + k, nhid:2 * nhid]                   # pre-scaled by 1/sqrt(nhid)
    b1 = p_ref[nhid + 0:nhid + 1, 2 * nhid:3 * nhid]
    b2 = p_ref[nhid + 1:nhid + 2, 2 * nhid:3 * nhid]
    b3 = p_ref[nhid + 2:nhid + 3, 2 * nhid:3 * nhid]
    b4 = p_ref[nhid + 3:nhid + 4, 2 * nhid:3 * nhid]
    b5 = p_ref[nhid + 4:nhid + 5, 3 * nhid:3 * nhid + nf]

    def gcn(x, w, b, xw_first):
        # A_norm @ X @ W + b ; association picked to minimize the held intermediate
        # ((A@X)@W when F_in < F_out, A@(X@W) otherwise).
        if xw_first:
            h = jnp.dot(a_norm, jnp.dot(x, w, preferred_element_type=f32),
                        preferred_element_type=f32)
        else:
            h = jnp.dot(jnp.dot(a_norm, x, preferred_element_type=f32), w,
                        preferred_element_type=f32)
        return h + b

    # ---- encoder ----
    x1 = jnp.tanh(gcn(x_ref[...], w1, b1, xw_first=False))       # nf   -> nhid
    x2 = jnp.tanh(gcn(x1, w2, b2, xw_first=True))                 # nhid -> nhid

    # ---- attention pooling ----
    # TODO(synk): exact `P` pooling module definition is not in the reference snippet;
    # single-head seed attention (softmax over nodes) matching the returned shapes is used.
    scores = lax.dot_general(seeds, x2, (((1,), (1,)), ((), ())),
                             preferred_element_type=f32)          # (k, n)
    e = jnp.exp(scores - jnp.max(scores, axis=-1, keepdims=True))
    attn = e / jnp.sum(e, axis=-1, keepdims=True)                 # exact softmax

    # ---- decoder reconstructions via  P = attn^T attn  (fewer MXU pushes) ----
    p_mat = lax.dot_general(attn, attn, (((0,), (0,)), ((), ())),
                            preferred_element_type=f32)           # (n, n)
    x_out = jnp.dot(p_mat, x2, preferred_element_type=f32)        # = attn^T (attn x2)
    adj_out = jnp.dot(jnp.dot(p_mat, adj, preferred_element_type=f32), p_mat,
                      preferred_element_type=f32)                 # = attn^T pool_adj attn

    # ---- decoder GCN layers ----
    x3 = jnp.tanh(gcn(x_out, w3, b3, xw_first=True))              # nhid -> nhid
    x4 = jnp.tanh(gcn(x3, w4, b4, xw_first=True))                 # nhid -> nhid
    x_rec = gcn(x4, w5, b5, xw_first=True)                        # nhid -> nf (no tanh)

    # ---- packed lane-dense output slab: [ x_rec | adj_out | zero pad ] ----
    out_w = out_ref.shape[1]
    out_ref[:, 0:nf] = x_rec
    out_ref[:, nf:nf + n] = adj_out
    if nf + n < out_w:
        out_ref[:, nf + n:out_w] = jnp.zeros((n, out_w - nf - n), f32)


# ----------------------------------------------------------------------------
# Host-side packing + wrapper
# ----------------------------------------------------------------------------
def pack_params(params, num_features, nhid, k):
    """Pack all weights/biases/seeds into one lane-dense f32 slab (single input DMA)."""
    assert num_features <= nhid and k <= nhid
    extra = _round_up(max(num_features, k, 5), 8)
    rows = nhid + extra
    cols = _round_up(4 * nhid, 128)
    scale = 1.0 / math.sqrt(nhid)
    slab = jnp.zeros((rows, cols), jnp.float32)
    slab = slab.at[0:nhid, 0:nhid].set(params["conv2_w"])
    slab = slab.at[0:nhid, nhid:2 * nhid].set(params["conv3_w"])
    slab = slab.at[0:nhid, 2 * nhid:3 * nhid].set(params["conv4_w"])
    slab = slab.at[0:nhid, 3 * nhid:3 * nhid + num_features].set(params["conv5_w"])
    slab = slab.at[nhid:nhid + num_features, 0:nhid].set(params["conv1_w"])
    slab = slab.at[nhid:nhid + k, nhid:2 * nhid].set(params["pool_seeds"] * scale)
    biases = jnp.concatenate([params["conv1_b"], params["conv2_b"],
                              params["conv3_b"], params["conv4_b"]], axis=0)
    slab = slab.at[nhid:nhid + 4, 2 * nhid:3 * nhid].set(biases)
    slab = slab.at[nhid + 4:nhid + 5, 3 * nhid:3 * nhid + num_features].set(params["conv5_b"])
    return slab


def to_dense_adj(edge_index, num_nodes):
    src, dst = edge_index
    a = jnp.zeros((num_nodes, num_nodes), jnp.float32)
    return a.at[src, dst].set(1.0)


@functools.partial(jax.jit, static_argnames=("num_features", "nhid", "k"))
def _forward_jit(nodes, edge_index, param_slab, *, num_features, nhid, k):
    n = nodes.shape[0]
    dense_adj = to_dense_adj(edge_index, n)       # un-normalized, no self-loops (spec)

    out_w = _round_up(num_features + n, 128)      # lane-dense packed output
    vmem = pl.BlockSpec(memory_space=pltpu.MemorySpace.VMEM)
    kern = functools.partial(_gst_ae_fused_kernel,
                             n=n, nf=num_features, nhid=nhid, k=k)
    out = pl.pallas_call(
        kern,
        in_specs=[vmem, vmem, vmem],
        out_specs=vmem,
        out_shape=jax.ShapeDtypeStruct((n, out_w), jnp.float32),
    )(dense_adj, nodes, param_slab)
    # TODO(synk): for batched graphs add a leading "parallel" grid axis (index_map keeps the
    # weight slab resident) to use both v7x TensorCores; for large N row-tile the adjacency
    # operands/outputs to stay under v7x's 64 MiB VMEM.
    x_rec = out[:, :num_features]
    adj_out = out[:, num_features:num_features + n]
    return x_rec, adj_out


def gst_ae_forward(param_slab, nodes, edge_index, batch, args):
    n = nodes.shape[0]
    k = int(n * args.ratio)
    x_rec, adj_out = _forward_jit(nodes, edge_index, param_slab,
                                  num_features=args.num_features,
                                  nhid=args.num_hidden, k=k)
    if args.recon_adj:
        # TODO(synk): dense_to_sparse(adj_out) produces a data-dependent edge set (dynamic
        # shape); not expressible with static Pallas tiling — recon_adj=False path used.
        pass
    return x_rec, adj_out[None, :, :], 0, 0


# ----------------------------------------------------------------------------
# Parameter init (glorot, matching GCNConv / seed-attention shapes)
# ----------------------------------------------------------------------------
def init_params(key, num_features, nhid, k):
    def glorot(key, fan_in, fan_out):
        lim = math.sqrt(6.0 / (fan_in + fan_out))
        return jax.random.uniform(key, (fan_in, fan_out), jnp.float32, -lim, lim)

    keys = jax.random.split(key, 7)
    return {
        "conv1_w": glorot(keys[0], num_features, nhid),
        "conv1_b": jnp.zeros((1, nhid), jnp.float32),
        "conv2_w": glorot(keys[1], nhid, nhid),
        "conv2_b": jnp.zeros((1, nhid), jnp.float32),
        "pool_seeds": glorot(keys[2], k, nhid),
        "conv3_w": glorot(keys[3], nhid, nhid),
        "conv3_b": jnp.zeros((1, nhid), jnp.float32),
        "conv4_w": glorot(keys[4], nhid, nhid),
        "conv4_b": jnp.zeros((1, nhid), jnp.float32),
        "conv5_w": glorot(keys[5], nhid, num_features),
        "conv5_b": jnp.zeros((1, num_features), jnp.float32),
    }


# ----------------------------------------------------------------------------
# main
# ----------------------------------------------------------------------------
if __name__ == "__main__":
    args = SimpleNamespace(num_features=8, num_hidden=32, ln=False,
                           ratio=0.5, recon_adj=False)
    n_nodes = 16
    k = int(n_nodes * args.ratio)

    key = jax.random.PRNGKey(0)
    k_x, k_p = jax.random.split(key)

    nodes = jax.random.normal(k_x, (n_nodes, args.num_features), jnp.float32)

    # bidirectional ring graph: 32 directed edges
    src = jnp.arange(n_nodes, dtype=jnp.int32)
    dst = (src + 1) % n_nodes
    edge_index = jnp.stack([jnp.concatenate([src, dst]),
                            jnp.concatenate([dst, src])], axis=0)   # (2, 32)
    batch = jnp.zeros((n_nodes,), jnp.int32)

    params = init_params(k_p, args.num_features, args.num_hidden, k)
    param_slab = pack_params(params, args.num_features, args.num_hidden, k)

    x_rec, adj_out, _, _ = gst_ae_forward(param_slab, nodes, edge_index, batch, args)
    jax.block_until_ready((x_rec, adj_out))

    assert x_rec.shape == (n_nodes, args.num_features)
    assert adj_out.shape == (1, n_nodes, n_nodes)
    assert bool(jnp.all(jnp.isfinite(x_rec))) and bool(jnp.all(jnp.isfinite(adj_out)))
    print("KERNEL_OK")
</pallas_src>

<mosaic_0001>
module attributes {stable_mosaic.version = 11 : i64} {
  func.func @_gst_ae_fused_kernel(%arg0: memref<16x16xf32, #tpu.memory_space<vmem>>, %arg1: memref<16x8xf32, #tpu.memory_space<vmem>>, %arg2: memref<40x128xf32, #tpu.memory_space<vmem>>, %arg3: memref<16x128xf32, #tpu.memory_space<vmem>>) attributes {dimension_semantics = [], scalar_prefetch = 0 : i64, scratch_operands = 0 : i64, tpu.core_type = #tpu.core_type<tc>} {
    %c0 = arith.constant 0 : index
    %c0_0 = arith.constant 0 : index
    %0 = vector.load %arg0[%c0, %c0_0] : memref<16x16xf32, #tpu.memory_space<vmem>>, vector<16x16xf32>
    %1 = tpu.iota {dimensions = array<i32: 0>} : vector<16x16xi32>
    %2 = tpu.iota {dimensions = array<i32: 1>} : vector<16x16xi32>
    %3 = arith.cmpi eq, %1, %2 : vector<16x16xi32>
    %4 = arith.extui %3 : vector<16x16xi1> to vector<16x16xi32>
    %5 = arith.sitofp %4 : vector<16x16xi32> to vector<16x16xf32>
    %6 = arith.addf %0, %5 : vector<16x16xf32>
    %cst = arith.constant dense<0.000000e+00> : vector<16xf32>
    %7 = vector.multi_reduction <add>, %6, %cst [1] : vector<16x16xf32> to vector<16xf32>
    %8 = vector.shape_cast %7 : vector<16xf32> to vector<16x1xf32>
    %cst_1 = arith.constant dense<0.000000e+00> : vector<16xf32>
    %9 = vector.multi_reduction <add>, %6, %cst_1 [0] : vector<16x16xf32> to vector<16xf32>
    %10 = vector.shape_cast %9 : vector<16xf32> to vector<1x16xf32>
    %cst_2 = arith.constant 0.000000e+00 : f32
    %11 = vector.broadcast %cst_2 : f32 to vector<16x1xf32>
    %12 = arith.cmpf ogt, %8, %11 : vector<16x1xf32>
    %13 = math.rsqrt %8 : vector<16x1xf32>
    %cst_3 = arith.constant 0.000000e+00 : f32
    %14 = vector.broadcast %cst_3 : f32 to vector<16x1xf32>
    %15 = arith.select %12, %13, %14 : vector<16x1xi1>, vector<16x1xf32>
    %cst_4 = arith.constant 0.000000e+00 : f32
    %16 = vector.broadcast %cst_4 : f32 to vector<1x16xf32>
    %17 = arith.cmpf ogt, %10, %16 : vector<1x16xf32>
    %18 = math.rsqrt %10 : vector<1x16xf32>
    %cst_5 = arith.constant 0.000000e+00 : f32
    %19 = vector.broadcast %cst_5 : f32 to vector<1x16xf32>
    %20 = arith.select %17, %18, %19 : vector<1x16xi1>, vector<1x16xf32>
    %21 = vector.broadcast %15 : vector<16x1xf32> to vector<16x16xf32>
    %22 = arith.mulf %6, %21 : vector<16x16xf32>
    %23 = vector.broadcast %20 : vector<1x16xf32> to vector<16x16xf32>
    %24 = arith.mulf %22, %23 : vector<16x16xf32>
    %c0_6 = arith.constant 0 : index
    %c0_7 = arith.constant 0 : index
    %25 = vector.load %arg2[%c0_6, %c0_7] : memref<40x128xf32, #tpu.memory_space<vmem>>, vector<32x32xf32>
    %c0_8 = arith.constant 0 : index
    %c32 = arith.constant 32 : index
    %26 = vector.load %arg2[%c0_8, %c32] : memref<40x128xf32, #tpu.memory_space<vmem>>, vector<32x32xf32>
    %c0_9 = arith.constant 0 : index
    %c64 = arith.constant 64 : index
    %27 = vector.load %arg2[%c0_9, %c64] : memref<40x128xf32, #tpu.memory_space<vmem>>, vector<32x32xf32>
    %c0_10 = arith.constant 0 : index
    %c96 = arith.constant 96 : index
    %28 = vector.load %arg2[%c0_10, %c96] : memref<40x128xf32, #tpu.memory_space<vmem>>, vector<32x8xf32>
    %c32_11 = arith.constant 32 : index
    %c0_12 = arith.constant 0 : index
    %29 = vector.load %arg2[%c32_11, %c0_12] : memref<40x128xf32, #tpu.memory_space<vmem>>, vector<8x32xf32>
    %c32_13 = arith.constant 32 : index
    %c32_14 = arith.constant 32 : index
    %30 = vector.load %arg2[%c32_13, %c32_14] : memref<40x128xf32, #tpu.memory_space<vmem>>, vector<8x32xf32>
    %c32_15 = arith.constant 32 : index
    %c64_16 = arith.constant 64 : index
    %31 = vector.load %arg2[%c32_15, %c64_16] : memref<40x128xf32, #tpu.memory_space<vmem>>, vector<1x32xf32>
    %c33 = arith.constant 33 : index
    %c64_17 = arith.constant 64 : index
    %32 = vector.load %arg2[%c33, %c64_17] : memref<40x128xf32, #tpu.memory_space<vmem>>, vector<1x32xf32>
    %c34 = arith.constant 34 : index
    %c64_18 = arith.constant 64 : index
    %33 = vector.load %arg2[%c34, %c64_18] : memref<40x128xf32, #tpu.memory_space<vmem>>, vector<1x32xf32>
    %c35 = arith.constant 35 : index
    %c64_19 = arith.constant 64 : index
    %34 = vector.load %arg2[%c35, %c64_19] : memref<40x128xf32, #tpu.memory_space<vmem>>, vector<1x32xf32>
    %c36 = arith.constant 36 : index
    %c96_20 = arith.constant 96 : index
    %35 = vector.load %arg2[%c36, %c96_20] : memref<40x128xf32, #tpu.memory_space<vmem>>, vector<1x8xf32>
    %c0_21 = arith.constant 0 : index
    %c0_22 = arith.constant 0 : index
    %36 = vector.load %arg1[%c0_21, %c0_22] : memref<16x8xf32, #tpu.memory_space<vmem>>, vector<16x8xf32>
    %cst_23 = arith.constant dense<0.000000e+00> : vector<16x8xf32>
    %37 = tpu.matmul %24, %36, %cst_23 {dimension_numbers = #tpu.dot_dimension_numbers<[1], [0], [0], [1], [0, 0, 1, 1], [], []>} : vector<16x16xf32>, vector<16x8xf32>, vector<16x8xf32> -> vector<16x8xf32>
    %cst_24 = arith.constant dense<0.000000e+00> : vector<16x32xf32>
    %38 = tpu.matmul %37, %29, %cst_24 {dimension_numbers = #tpu.dot_dimension_numbers<[1], [0], [0], [1], [0, 0, 1, 1], [], []>} : vector<16x8xf32>, vector<8x32xf32>, vector<16x32xf32> -> vector<16x32xf32>
    %39 = vector.broadcast %31 : vector<1x32xf32> to vector<16x32xf32>
    %40 = arith.addf %38, %39 : vector<16x32xf32>
    %41 = math.tanh %40 : vector<16x32xf32>
    %cst_25 = arith.constant dense<0.000000e+00> : vector<16x32xf32>
    %42 = tpu.matmul %41, %25, %cst_25 {dimension_numbers = #tpu.dot_dimension_numbers<[1], [0], [0], [1], [0, 0, 1, 1], [], []>} : vector<16x32xf32>, vector<32x32xf32>, vector<16x32xf32> -> vector<16x32xf32>
    %cst_26 = arith.constant dense<0.000000e+00> : vector<16x32xf32>
    %43 = tpu.matmul %24, %42, %cst_26 {dimension_numbers = #tpu.dot_dimension_numbers<[1], [0], [0], [1], [0, 0, 1, 1], [], []>} : vector<16x16xf32>, vector<16x32xf32>, vector<16x32xf32> -> vector<16x32xf32>
    %44 = vector.broadcast %32 : vector<1x32xf32> to vector<16x32xf32>
    %45 = arith.addf %43, %44 : vector<16x32xf32>
    %46 = math.tanh %45 : vector<16x32xf32>
    %cst_27 = arith.constant dense<0.000000e+00> : vector<8x16xf32>
    %47 = tpu.matmul %30, %46, %cst_27 {dimension_numbers = #tpu.dot_dimension_numbers<[1], [1], [0], [0], [0, 0, 1, 0], [], []>} : vector<8x32xf32>, vector<16x32xf32>, vector<8x16xf32> -> vector<8x16xf32>
    %cst_28 = arith.constant dense<0xFF800000> : vector<8xf32>
    %48 = vector.multi_reduction <maximumf>, %47, %cst_28 [1] : vector<8x16xf32> to vector<8xf32>
    %49 = vector.shape_cast %48 : vector<8xf32> to vector<8x1xf32>
    %50 = vector.broadcast %49 : vector<8x1xf32> to vector<8x16xf32>
    %51 = arith.subf %47, %50 : vector<8x16xf32>
    %52 = math.exp %51 : vector<8x16xf32>
    %cst_29 = arith.constant dense<0.000000e+00> : vector<8xf32>
    %53 = vector.multi_reduction <add>, %52, %cst_29 [1] : vector<8x16xf32> to vector<8xf32>
    %54 = vector.shape_cast %53 : vector<8xf32> to vector<8x1xf32>
    %55 = vector.broadcast %54 : vector<8x1xf32> to vector<8x16xf32>
    %56 = arith.divf %52, %55 : vector<8x16xf32>
    %cst_30 = arith.constant dense<0.000000e+00> : vector<16x16xf32>
    %57 = tpu.matmul %56, %56, %cst_30 {dimension_numbers = #tpu.dot_dimension_numbers<[0], [0], [1], [1], [0, 1, 1, 1], [], []>} : vector<8x16xf32>, vector<8x16xf32>, vector<16x16xf32> -> vector<16x16xf32>
    %cst_31 = arith.constant dense<0.000000e+00> : vector<16x32xf32>
    %58 = tpu.matmul %57, %46, %cst_31 {dimension_numbers = #tpu.dot_dimension_numbers<[1], [0], [0], [1], [0, 0, 1, 1], [], []>} : vector<16x16xf32>, vector<16x32xf32>, vector<16x32xf32> -> vector<16x32xf32>
    %cst_32 = arith.constant dense<0.000000e+00> : vector<16x16xf32>
    %59 = tpu.matmul %57, %0, %cst_32 {dimension_numbers = #tpu.dot_dimension_numbers<[1], [0], [0], [1], [0, 0, 1, 1], [], []>} : vector<16x16xf32>, vector<16x16xf32>, vector<16x16xf32> -> vector<16x16xf32>
    %cst_33 = arith.constant dense<0.000000e+00> : vector<16x16xf32>
    %60 = tpu.matmul %59, %57, %cst_33 {dimension_numbers = #tpu.dot_dimension_numbers<[1], [0], [0], [1], [0, 0, 1, 1], [], []>} : vector<16x16xf32>, vector<16x16xf32>, vector<16x16xf32> -> vector<16x16xf32>
    %cst_34 = arith.constant dense<0.000000e+00> : vector<16x32xf32>
    %61 = tpu.matmul %58, %26, %cst_34 {dimension_numbers = #tpu.dot_dimension_numbers<[1], [0], [0], [1], [0, 0, 1, 1], [], []>} : vector<16x32xf32>, vector<32x32xf32>, vector<16x32xf32> -> vector<16x32xf32>
    %cst_35 = arith.constant dense<0.000000e+00> : vector<16x32xf32>
    %62 = tpu.matmul %24, %61, %cst_35 {dimension_numbers = #tpu.dot_dimension_numbers<[1], [0], [0], [1], [0, 0, 1, 1], [], []>} : vector<16x16xf32>, vector<16x32xf32>, vector<16x32xf32> -> vector<16x32xf32>
    %63 = vector.broadcast %33 : vector<1x32xf32> to vector<16x32xf32>
    %64 = arith.addf %62, %63 : vector<16x32xf32>
    %65 = math.tanh %64 : vector<16x32xf32>
    %cst_36 = arith.constant dense<0.000000e+00> : vector<16x32xf32>
    %66 = tpu.matmul %65, %27, %cst_36 {dimension_numbers = #tpu.dot_dimension_numbers<[1], [0], [0], [1], [0, 0, 1, 1], [], []>} : vector<16x32xf32>, vector<32x32xf32>, vector<16x32xf32> -> vector<16x32xf32>
    %cst_37 = arith.constant dense<0.000000e+00> : vector<16x32xf32>
    %67 = tpu.matmul %24, %66, %cst_37 {dimension_numbers = #tpu.dot_dimension_numbers<[1], [0], [0], [1], [0, 0, 1, 1], [], []>} : vector<16x16xf32>, vector<16x32xf32>, vector<16x32xf32> -> vector<16x32xf32>
    %68 = vector.broadcast %34 : vector<1x32xf32> to vector<16x32xf32>
    %69 = arith.addf %67, %68 : vector<16x32xf32>
    %70 = math.tanh %69 : vector<16x32xf32>
    %cst_38 = arith.constant dense<0.000000e+00> : vector<16x8xf32>
    %71 = tpu.matmul %70, %28, %cst_38 {dimension_numbers = #tpu.dot_dimension_numbers<[1], [0], [0], [1], [0, 0, 1, 1], [], []>} : vector<16x32xf32>, vector<32x8xf32>, vector<16x8xf32> -> vector<16x8xf32>
    %cst_39 = arith.constant dense<0.000000e+00> : vector<16x8xf32>
    %72 = tpu.matmul %24, %71, %cst_39 {dimension_numbers = #tpu.dot_dimension_numbers<[1], [0], [0], [1], [0, 0, 1, 1], [], []>} : vector<16x16xf32>, vector<16x8xf32>, vector<16x8xf32> -> vector<16x8xf32>
    %73 = vector.broadcast %35 : vector<1x8xf32> to vector<16x8xf32>
    %74 = arith.addf %72, %73 : vector<16x8xf32>
    %c0_40 = arith.constant 0 : index
    %c0_41 = arith.constant 0 : index
    %75 = vector.load %arg3[%c0_40, %c0_41] : memref<16x128xf32, #tpu.memory_space<vmem>>, vector<16x8xf32>
    tpu.vector_store %arg3[%c0_40, %c0_41], %74 {strides = array<i32>} : memref<16x128xf32, #tpu.memory_space<vmem>>, vector<16x8xf32>,
    %c0_42 = arith.constant 0 : index
    %c8 = arith.constant 8 : index
    %76 = vector.load %arg3[%c0_42, %c8] : memref<16x128xf32, #tpu.memory_space<vmem>>, vector<16x16xf32>
    tpu.vector_store %arg3[%c0_42, %c8], %60 {strides = array<i32>} : memref<16x128xf32, #tpu.memory_space<vmem>>, vector<16x16xf32>,
    %cst_43 = arith.constant 0.000000e+00 : f32
    %77 = vector.broadcast %cst_43 : f32 to vector<16x104xf32>
    %c0_44 = arith.constant 0 : index
    %c24 = arith.constant 24 : index
    %78 = vector.load %arg3[%c0_44, %c24] : memref<16x128xf32, #tpu.memory_space<vmem>>, vector<16x104xf32>
    tpu.vector_store %arg3[%c0_44, %c24], %77 {strides = array<i32>} : memref<16x128xf32, #tpu.memory_space<vmem>>, vector<16x104xf32>,
    return
  }
}

</mosaic_0001>

<llo_original>
// kernel: _forward_jit.1
$region0: #{_forward_jit.1}
  #allocation0 [shape = 'u32[]', space=smem, size = 0x4, offset = 0x4, fixed_abs, tag = 'smem constant byte address 0x4 - core index']
  #allocation1 [shape = 'u32[144,128]{1,0:T(1,128)}', space=vmem, size = 0x12000, scoped, tag = 'internal scratch']
  %s0 = inlined_call_operand.vmem [shape: f32[16,16], index: 0, kind: input, shape index: {}]
  %s1 = inlined_call_operand.vmem [shape: f32[16,8], index: 1, kind: input, shape index: {}]
  %s2 = inlined_call_operand.vmem [shape: f32[40,128], index: 2, kind: input, shape index: {}]
  %s3 = inlined_call_operand.vmem [shape: f32[16,128], index: 3, kind: output, shape index: {}]
  %s4 = sld [smem:[#allocation0]]
  $region22: #{_forward_jit.1} parent=0
    _
  %s6 = ssub.s32 1, %s4
  %s7 = scalar_select 0, %s6, %s4
  // Predicated region
  $region2: #{_forward_jit.1} parent=0 // pred_check
    _
  $region3: #{_forward_jit.1} parent=0 // pred_check_branch
    %9 = sbr.rel (0) target = $region5
  $region4: #{_forward_jit.1} parent=0 // pred_region
    _
  $region5: #{_forward_jit.1} parent=0 // pred_fallthru
    _
  // Predicated region
  $region6: #{_forward_jit.1} parent=0 // pred_check
    _
  $region7: #{_forward_jit.1} parent=0 // pred_check_branch
    %11 = sbr.rel (0) target = $region9
  $region8: #{_forward_jit.1} parent=0 // pred_region
    _
  $region9: #{_forward_jit.1} parent=0 // pred_fallthru
    _
  // Predicated region
  $region10: #{_forward_jit.1} parent=0 // pred_check
    _
  $region11: #{_forward_jit.1} parent=0 // pred_check_branch
    %13 = sbr.rel (0) target = $region13
  $region12: #{_forward_jit.1} parent=0 // pred_region
    _
  $region13: #{_forward_jit.1} parent=0 // pred_fallthru
    _
  %v14 = vld [vmem:[%s0] sm:$0xff]
  %v15 = vld [vmem:[%s0 + $0x8] sm:$0xff]
  %v16 = vlaneseq
  %v17 = vshrl.u32 %v16, 7
  %v18 = vadd.s32 %v17, 8
  %v19 = vlaneseq
  %v20 = vand.u32 %v19, 127
  %vm21 = vcmp.eq.s32.totalorder %v17, %v20
  %vm22 = vcmp.eq.s32.totalorder %v18, %v20
  %v23 = vsel %vm21, 1, 0
  %v24 = vsel %vm22, 1, 0
  %v25 = vcvt.s32.f32 %v23
  %v26 = vcvt.s32.f32 %v24
  %v27 = vadd.f32 %v14, %v25
  %v28 = vadd.f32 %v15, %v26
  %vm29 = vcmask 130048
  %v30 = vsel %vm29, %v27, 0.0
  %31 = vadd.xlane.f32.xlu0 %v30
  %v32 = vpop.xlane.xlu0 %31
  %v33 = vsel %vm29, %v28, 0.0
  %34 = vadd.xlane.f32.xlu0 %v33
  %v35 = vpop.xlane.xlu0 %34
  %v36 = vadd.f32 %v30, %v33
  %v37 = vrot.slane %v36, 4
  %v38 = vadd.f32 %v36, %v37
  %v39 = vrot.slane %v38, 2
  %v40 = vadd.f32 %v38, %v39
  %v41 = vrot.slane %v40, 1
  %v42 = vadd.f32 %v40, %v41
  %vm43 = vcmp.gt.f32.partialorder %v32, 0.0
  %vm44 = vcmp.gt.f32.partialorder %v35, 0.0
  %v45 = vrsqrt.pop %v32
  %v46 = vrsqrt.pop %v35
  %v47 = vsel %vm43, %v45, 0.0
  %v48 = vsel %vm44, %v46, 0.0
  %vm49 = vcmp.gt.f32.partialorder %v42, 0.0
  %v50 = vrsqrt.pop %v42
  %v51 = vsel %vm49, %v50, 0.0
  %v52 = vmul.f32 %v27, %v47
  %v53 = vmul.f32 %v28, %v48
  %v54 = vmul.f32 %v52, %v51
  %v55 = vmul.f32 %v53, %v51
  %v56 = vld [vmem:[%s2] sm:$0xff]
  %v57 = vld [vmem:[%s2 + $0x8] sm:$0xff]
  %v58 = vld [vmem:[%s2 + $0x10] sm:$0xff]
  %v59 = vld [vmem:[%s2 + $0x18] sm:$0xff]
  %v60 = vld [vmem:[%s2 + $0x20] sm:$0xff]
  %v61 = vld [vmem:[%s2 + $0x20] sm:$0x1]
  %v62 = vld [vmem:[%s2 + $0x21] sm:$0x1]
  %v63 = vld [vmem:[%s2 + $0x22] sm:$0x1]
  %v64 = vld [vmem:[%s2 + $0x23] sm:$0x1]
  %v65 = vld [vmem:[%s2 + $0x24] sm:$0x1]
  %v66 = vld [vmem:[%s1] sm:$0xff]
  %v67 = vld [vmem:[%s1 + $0x8] sm:$0xff]
  %v69 = vsel %vm29, %v54, 0
  %v72 = vsel %vm29, %v55, 0
  %74 = vmatprep.subr.mxu0 0.0
  %75 = vmatpush1.msra.mxu0 %v66
  %76 = vmatprep.subr.mxu0 0.0
  %77 = vmatpush1.msra.mxu0 %v67
  %78 = vmatprep.subr.mxu0 0.0
  %79 = vmatpush1.msra.mxu0 0.0
  %80 = vmatprep.subr.mxu0 0.0
  %81 = vmatpush1.msra.mxu0 0.0
  %82 = vmatprep.subr.mxu0 0.0
  %83 = vmatpush1.msra.mxu0 0.0
  %84 = vmatprep.subr.mxu0 0.0
  %85 = vmatpush1.msra.mxu0 0.0
  %86 = vmatprep.subr.mxu0 0.0
  %87 = vmatpush1.msra.mxu0 0.0
  %88 = vmatprep.subr.mxu0 0.0
  %89 = vmatpush1.msra.mxu0 0.0
  %90 = vmatprep.subr.mxu0 0.0
  %91 = vmatpush1.msra.mxu0 0.0
  %92 = vmatprep.subr.mxu0 0.0
  %93 = vmatpush1.msra.mxu0 0.0
  %94 = vmatprep.subr.mxu0 0.0
  %95 = vmatpush1.msra.mxu0 0.0
  %96 = vmatprep.subr.mxu0 0.0
  %97 = vmatpush1.msra.mxu0 0.0
  %98 = vmatprep.subr.mxu0 0.0
  %99 = vmatpush1.msra.mxu0 0.0
  %100 = vmatprep.subr.mxu0 0.0
  %101 = vmatpush1.msra.mxu0 0.0
  %102 = vmatprep.subr.mxu0 0.0
  %103 = vmatpush1.msra.mxu0 0.0
  %104 = vmatprep.subr.mxu0 0.0
  %105 = vmatpush1.msra.mxu0 0.0
  %106 = vmatprep.subr.mxu0 0.0
  %107 = vmatpush1.msra.mxu0 0.0
  %108 = vmatprep.subr.mxu0 0.0
  %109 = vmatpush1.msra.mxu0 0.0
  %110 = vmatprep.subr.mxu0 0.0
  %111 = vmatpush1.msra.mxu0 0.0
  %112 = vmatprep.subr.mxu0 0.0
  %113 = vmatpush1.msra.mxu0 0.0
  %114 = vmatprep.subr.mxu0 0.0
  %115 = vmatpush1.msra.mxu0 0.0
  %116 = vmatprep.subr.mxu0 0.0
  %117 = vmatpush1.msra.mxu0 0.0
  %118 = vmatprep.subr.mxu0 0.0
  %119 = vmatpush1.msra.mxu0 0.0
  %120 = vmatprep.subr.mxu0 0.0
  %121 = vmatpush1.msra.mxu0 0.0
  %122 = vmatprep.subr.mxu0 0.0
  %123 = vmatpush1.msra.mxu0 0.0
  %124 = vmatprep.subr.mxu0 0.0
  %125 = vmatpush1.msra.mxu0 0.0
  %126 = vmatprep.subr.mxu0 0.0
  %127 = vmatpush1.msra.mxu0 0.0
  %128 = vmatprep.subr.mxu0 0.0
  %129 = vmatpush1.msra.mxu0 0.0
  %130 = vmatprep.subr.mxu0 0.0
  %131 = vmatpush1.msra.mxu0 0.0
  %132 = vmatprep.subr.mxu0 0.0
  %133 = vmatpush1.msra.mxu0 0.0
  %134 = vmatprep.subr.mxu0 0.0
  %135 = vmatpush1.msra.mxu0 0.0
  %136 = vmatprep.subr.mxu0 0.0
  %137 = vmatpush1.msra.mxu0 0.0
  %138 = vmatprep.mubr.f32.mxu0 0.0
  %139 = vmatmul.mubr.f32.gmra.mrb[0].mxu0 %v69
  %v140 = vpop.f32.mrb[0].mxu0
  %v141 = vadd.f32 0.0, %v140
  %v142 = vpop.f32.mrb[0].mxu0
  %143 = vmatprep.mubr.f32.mxu0 0.0
  %144 = vmatmul.mubr.f32.gmra.mrb[0].mxu0 %v72
  %v145 = vpop.f32.mrb[0].mxu0
  %v146 = vadd.f32 0.0, %v145
  %v147 = vpop.f32.mrb[0].mxu0
  %148 = vdwg.mxu0
  %v149 = vlaneseq
  %v150 = vshrl.u32 %v149, 7
  %v151 = vsub.s32 0, %v150
  %v152 = vrot.slane %v61, %v151
  %154 = vrot.lane.b32.xlu0 %v152, 64
  %v155 = vpop.permute.xlu0 %154
  %vm157 = vcmask 64512
  %v159 = vsel %vm157, %v141, 0
  %v162 = vsel %vm157, %v146, 0
  %164 = vmatprep.subr.mxu0 0.0
  %165 = vmatpush1.msra.mxu0 %v60
  %166 = vmatprep.subr.mxu0 0.0
  %167 = vmatpush1.msra.mxu0 0.0
  %168 = vmatprep.subr.mxu0 0.0
  %169 = vmatpush1.msra.mxu0 0.0
  %170 = vmatprep.subr.mxu0 0.0
  %171 = vmatpush1.msra.mxu0 0.0
  %172 = vmatprep.subr.mxu0 0.0
  %173 = vmatpush1.msra.mxu0 0.0
  %174 = vmatprep.subr.mxu0 0.0
  %175 = vmatpush1.msra.mxu0 0.0
  %176 = vmatprep.subr.mxu0 0.0
  %177 = vmatpush1.msra.mxu0 0.0
  %178 = vmatprep.subr.mxu0 0.0
  %179 = vmatpush1.msra.mxu0 0.0
  %180 = vmatprep.subr.mxu0 0.0
  %181 = vmatpush1.msra.mxu0 0.0
  %182 = vmatprep.subr.mxu0 0.0
  %183 = vmatpush1.msra.mxu0 0.0
  %184 = vmatprep.subr.mxu0 0.0
  %185 = vmatpush1.msra.mxu0 0.0
  %186 = vmatprep.subr.mxu0 0.0
  %187 = vmatpush1.msra.mxu0 0.0
  %188 = vmatprep.subr.mxu0 0.0
  %189 = vmatpush1.msra.mxu0 0.0
  %190 = vmatprep.subr.mxu0 0.0
  %191 = vmatpush1.msra.mxu0 0.0
  %192 = vmatprep.subr.mxu0 0.0
  %193 = vmatpush1.msra.mxu0 0.0
  %194 = vmatprep.subr.mxu0 0.0
  %195 = vmatpush1.msra.mxu0 0.0
  %196 = vmatprep.subr.mxu0 0.0
  %197 = vmatpush1.msra.mxu0 0.0
  %198 = vmatprep.subr.mxu0 0.0
  %199 = vmatpush1.msra.mxu0 0.0
  %200 = vmatprep.subr.mxu0 0.0
  %201 = vmatpush1.msra.mxu0 0.0
  %202 = vmatprep.subr.mxu0 0.0
  %203 = vmatpush1.msra.mxu0 0.0
  %204 = vmatprep.subr.mxu0 0.0
  %205 = vmatpush1.msra.mxu0 0.0
  %206 = vmatprep.subr.mxu0 0.0
  %207 = vmatpush1.msra.mxu0 0.0
  %208 = vmatprep.subr.mxu0 0.0
  %209 = vmatpush1.msra.mxu0 0.0
  %210 = vmatprep.subr.mxu0 0.0
  %211 = vmatpush1.msra.mxu0 0.0
  %212 = vmatprep.subr.mxu0 0.0
  %213 = vmatpush1.msra.mxu0 0.0
  %214 = vmatprep.subr.mxu0 0.0
  %215 = vmatpush1.msra.mxu0 0.0
  %216 = vmatprep.subr.mxu0 0.0
  %217 = vmatpush1.msra.mxu0 0.0
  %218 = vmatprep.subr.mxu0 0.0
  %219 = vmatpush1.msra.mxu0 0.0
  %220 = vmatprep.subr.mxu0 0.0
  %221 = vmatpush1.msra.mxu0 0.0
  %222 = vmatprep.subr.mxu0 0.0
  %223 = vmatpush1.msra.mxu0 0.0
  %224 = vmatprep.subr.mxu0 0.0
  %225 = vmatpush1.msra.mxu0 0.0
  %226 = vmatprep.subr.mxu0 0.0
  %227 = vmatpush1.msra.mxu0 0.0
  %228 = vmatprep.mubr.f32.mxu0 0.0
  %229 = vmatmul.mubr.f32.gmra.mrb[0].mxu0 %v159
  %v230 = vpop.f32.mrb[0].mxu0
  %v231 = vadd.f32 %v155, %v230
  %v232 = vpop.f32.mrb[0].mxu0
  %233 = vmatprep.mubr.f32.mxu0 0.0
  %234 = vmatmul.mubr.f32.gmra.mrb[0].mxu0 %v162
  %v235 = vpop.f32.mrb[0].mxu0
  %v236 = vadd.f32 %v155, %v235
  %v237 = vpop.f32.mrb[0].mxu0
  %238 = vdwg.mxu0
  %v239 = vtanh.pop %v231
  %v240 = vtanh.pop %v236
  %vm241 = vcmask 261120
  %v243 = vsel %vm241, %v239, 0
  %v246 = vsel %vm241, %v240, 0
  %248 = vmatprep.subr.mxu0 0.0
  %249 = vmatpush1.msra.mxu0 %v56
  %250 = vmatprep.subr.mxu0 0.0
  %251 = vmatpush1.msra.mxu0 %v57
  %252 = vmatprep.subr.mxu0 0.0
  %253 = vmatpush1.msra.mxu0 %v58
  %254 = vmatprep.subr.mxu0 0.0
  %255 = vmatpush1.msra.mxu0 %v59
  %256 = vmatprep.subr.mxu0 0.0
  %257 = vmatpush1.msra.mxu0 0.0
  %258 = vmatprep.subr.mxu0 0.0
  %259 = vmatpush1.msra.mxu0 0.0
  %260 = vmatprep.subr.mxu0 0.0
  %261 = vmatpush1.msra.mxu0 0.0
  %262 = vmatprep.subr.mxu0 0.0
  %263 = vmatpush1.msra.mxu0 0.0
  %264 = vmatprep.subr.mxu0 0.0
  %265 = vmatpush1.msra.mxu0 0.0
  %266 = vmatprep.subr.mxu0 0.0
  %267 = vmatpush1.msra.mxu0 0.0
  %268 = vmatprep.subr.mxu0 0.0
  %269 = vmatpush1.msra.mxu0 0.0
  %270 = vmatprep.subr.mxu0 0.0
  %271 = vmatpush1.msra.mxu0 0.0
  %272 = vmatprep.subr.mxu0 0.0
  %273 = vmatpush1.msra.mxu0 0.0
  %274 = vmatprep.subr.mxu0 0.0
  %275 = vmatpush1.msra.mxu0 0.0
  %276 = vmatprep.subr.mxu0 0.0
  %277 = vmatpush1.msra.mxu0 0.0
  %278 = vmatprep.subr.mxu0 0.0
  %279 = vmatpush1.msra.mxu0 0.0
  %280 = vmatprep.subr.mxu0 0.0
  %281 = vmatpush1.msra.mxu0 0.0
  %282 = vmatprep.subr.mxu0 0.0
  %283 = vmatpush1.msra.mxu0 0.0
  %284 = vmatprep.subr.mxu0 0.0
  %285 = vmatpush1.msra.mxu0 0.0
  %286 = vmatprep.subr.mxu0 0.0
  %287 = vmatpush1.msra.mxu0 0.0
  %288 = vmatprep.subr.mxu0 0.0
  %289 = vmatpush1.msra.mxu0 0.0
  %290 = vmatprep.subr.mxu0 0.0
  %291 = vmatpush1.msra.mxu0 0.0
  %292 = vmatprep.subr.mxu0 0.0
  %293 = vmatpush1.msra.mxu0 0.0
  %294 = vmatprep.subr.mxu0 0.0
  %295 = vmatpush1.msra.mxu0 0.0
  %296 = vmatprep.subr.mxu0 0.0
  %297 = vmatpush1.msra.mxu0 0.0
  %298 = vmatprep.subr.mxu0 0.0
  %299 = vmatpush1.msra.mxu0 0.0
  %300 = vmatprep.subr.mxu0 0.0
  %301 = vmatpush1.msra.mxu0 0.0
  %302 = vmatprep.subr.mxu0 0.0
  %303 = vmatpush1.msra.mxu0 0.0
  %304 = vmatprep.subr.mxu0 0.0
  %305 = vmatpush1.msra.mxu0 0.0
  %306 = vmatprep.subr.mxu0 0.0
  %307 = vmatpush1.msra.mxu0 0.0
  %308 = vmatprep.subr.mxu0 0.0
  %309 = vmatpush1.msra.mxu0 0.0
  %310 = vmatprep.subr.mxu0 0.0
  %311 = vmatpush1.msra.mxu0 0.0
  %312 = vmatprep.mubr.f32.mxu0 0.0
  %313 = vmatmul.mubr.f32.gmra.mrb[0].mxu0 %v243
  %v314 = vpop.f32.mrb[0].mxu0
  %v315 = vadd.f32 0.0, %v314
  %v316 = vpop.f32.mrb[0].mxu0
  %317 = vmatprep.mubr.f32.mxu0 0.0
  %318 = vmatmul.mubr.f32.gmra.mrb[0].mxu0 %v246
  %v319 = vpop.f32.mrb[0].mxu0
  %v320 = vadd.f32 0.0, %v319
  %v321 = vpop.f32.mrb[0].mxu0
  %322 = vdwg.mxu0
  %v323 = vlaneseq
  %v324 = vshrl.u32 %v323, 7
  %v325 = vsub.s32 0, %v324
  %v326 = vrot.slane %v62, %v325
  %328 = vrot.lane.b32.xlu0 %v326, 64
  %v329 = vpop.permute.xlu0 %328
  %331 = vmatprep.subr.mxu0 0.0
  %332 = vmatpush1.msra.mxu0 %v315
  %333 = vmatprep.subr.mxu0 0.0
  %334 = vmatpush1.msra.mxu0 %v320
  %335 = vmatprep.subr.mxu0 0.0
  %336 = vmatpush1.msra.mxu0 0.0
  %337 = vmatprep.subr.mxu0 0.0
  %338 = vmatpush1.msra.mxu0 0.0
  %339 = vmatprep.subr.mxu0 0.0
  %340 = vmatpush1.msra.mxu0 0.0
  %341 = vmatprep.subr.mxu0 0.0
  %342 = vmatpush1.msra.mxu0 0.0
  %343 = vmatprep.subr.mxu0 0.0
  %344 = vmatpush1.msra.mxu0 0.0
  %345 = vmatprep.subr.mxu0 0.0
  %346 = vmatpush1.msra.mxu0 0.0
  %347 = vmatprep.subr.mxu0 0.0
  %348 = vmatpush1.msra.mxu0 0.0
  %349 = vmatprep.subr.mxu0 0.0
  %350 = vmatpush1.msra.mxu0 0.0
  %351 = vmatprep.subr.mxu0 0.0
  %352 = vmatpush1.msra.mxu0 0.0
  %353 = vmatprep.subr.mxu0 0.0
  %354 = vmatpush1.msra.mxu0 0.0
  %355 = vmatprep.subr.mxu0 0.0
  %356 = vmatpush1.msra.mxu0 0.0
  %357 = vmatprep.subr.mxu0 0.0
  %358 = vmatpush1.msra.mxu0 0.0
  %359 = vmatprep.subr.mxu0 0.0
  %360 = vmatpush1.msra.mxu0 0.0
  %361 = vmatprep.subr.mxu0 0.0
  %362 = vmatpush1.msra.mxu0 0.0
  %363 = vmatprep.subr.mxu0 0.0
  %364 = vmatpush1.msra.mxu0 0.0
  %365 = vmatprep.subr.mxu0 0.0
  %366 = vmatpush1.msra.mxu0 0.0
  %367 = vmatprep.subr.mxu0 0.0
  %368 = vmatpush1.msra.mxu0 0.0
  %369 = vmatprep.subr.mxu0 0.0
  %370 = vmatpush1.msra.mxu0 0.0
  %371 = vmatprep.subr.mxu0 0.0
  %372 = vmatpush1.msra.mxu0 0.0
  %373 = vmatprep.subr.mxu0 0.0
  %374 = vmatpush1.msra.mxu0 0.0
  %375 = vmatprep.subr.mxu0 0.0
  %376 = vmatpush1.msra.mxu0 0.0
  %377 = vmatprep.subr.mxu0 0.0
  %378 = vmatpush1.msra.mxu0 0.0
  %379 = vmatprep.subr.mxu0 0.0
  %380 = vmatpush1.msra.mxu0 0.0
  %381 = vmatprep.subr.mxu0 0.0
  %382 = vmatpush1.msra.mxu0 0.0
  %383 = vmatprep.subr.mxu0 0.0
  %384 = vmatpush1.msra.mxu0 0.0
  %385 = vmatprep.subr.mxu0 0.0
  %386 = vmatpush1.msra.mxu0 0.0
  %387 = vmatprep.subr.mxu0 0.0
  %388 = vmatpush1.msra.mxu0 0.0
  %389 = vmatprep.subr.mxu0 0.0
  %390 = vmatpush1.msra.mxu0 0.0
  %391 = vmatprep.subr.mxu0 0.0
  %392 = vmatpush1.msra.mxu0 0.0
  %393 = vmatprep.subr.mxu0 0.0
  %394 = vmatpush1.msra.mxu0 0.0
  %395 = vmatprep.mubr.f32.mxu0 0.0
  %396 = vmatmul.mubr.f32.gmra.mrb[0].mxu0 %v69
  %v397 = vpop.f32.mrb[0].mxu0
  %v398 = vadd.f32 %v329, %v397
  %v399 = vpop.f32.mrb[0].mxu0
  %400 = vmatprep.mubr.f32.mxu0 0.0
  %401 = vmatmul.mubr.f32.gmra.mrb[0].mxu0 %v72
  %v402 = vpop.f32.mrb[0].mxu0
  %v403 = vadd.f32 %v329, %v402
  %v404 = vpop.f32.mrb[0].mxu0
  %405 = vdwg.mxu0
  %v406 = vtanh.pop %v398
  %v407 = vtanh.pop %v403
  %409 = vrot.lane.b32.xlu0 %v60, 96
  %v410 = vpop.permute.xlu0 %409
  %v411 = vsel %vm241, %v410, 0
  %v414 = vsel %vm241, %v406, 0
  %v417 = vsel %vm241, %v407, 0
  %419 = vmatprep.subr.mxu0 0.0
  %420 = vmatpush1.xpose.msra.mxu0 %v414
  %421 = vmatprep.subr.mxu0 0.0
  %422 = vmatpush1.xpose.msra.mxu0 %v417
  %423 = vmatprep.subr.mxu0 0.0
  %424 = vmatpush1.xpose.msra.mxu0 0.0
  %425 = vmatprep.subr.mxu0 0.0
  %426 = vmatpush1.xpose.msra.mxu0 0.0
  %427 = vmatprep.subr.mxu0 0.0
  %428 = vmatpush1.xpose.msra.mxu0 0.0
  %429 = vmatprep.subr.mxu0 0.0
  %430 = vmatpush1.xpose.msra.mxu0 0.0
  %431 = vmatprep.subr.mxu0 0.0
  %432 = vmatpush1.xpose.msra.mxu0 0.0
  %433 = vmatprep.subr.mxu0 0.0
  %434 = vmatpush1.xpose.msra.mxu0 0.0
  %435 = vmatprep.subr.mxu0 0.0
  %436 = vmatpush1.xpose.msra.mxu0 0.0
  %437 = vmatprep.subr.mxu0 0.0
  %438 = vmatpush1.xpose.msra.mxu0 0.0
  %439 = vmatprep.subr.mxu0 0.0
  %440 = vmatpush1.xpose.msra.mxu0 0.0
  %441 = vmatprep.subr.mxu0 0.0
  %442 = vmatpush1.xpose.msra.mxu0 0.0
  %443 = vmatprep.subr.mxu0 0.0
  %444 = vmatpush1.xpose.msra.mxu0 0.0
  %445 = vmatprep.subr.mxu0 0.0
  %446 = vmatpush1.xpose.msra.mxu0 0.0
  %447 = vmatprep.subr.mxu0 0.0
  %448 = vmatpush1.xpose.msra.mxu0 0.0
  %449 = vmatprep.subr.mxu0 0.0
  %450 = vmatpush1.xpose.msra.mxu0 0.0
  %451 = vmatprep.subr.mxu0 0.0
  %452 = vmatpush1.xpose.msra.mxu0 0.0
  %453 = vmatprep.subr.mxu0 0.0
  %454 = vmatpush1.xpose.msra.mxu0 0.0
  %455 = vmatprep.subr.mxu0 0.0
  %456 = vmatpush1.xpose.msra.mxu0 0.0
  %457 = vmatprep.subr.mxu0 0.0
  %458 = vmatpush1.xpose.msra.mxu0 0.0
  %459 = vmatprep.subr.mxu0 0.0
  %460 = vmatpush1.xpose.msra.mxu0 0.0
  %461 = vmatprep.subr.mxu0 0.0
  %462 = vmatpush1.xpose.msra.mxu0 0.0
  %463 = vmatprep.subr.mxu0 0.0
  %464 = vmatpush1.xpose.msra.mxu0 0.0
  %465 = vmatprep.subr.mxu0 0.0
  %466 = vmatpush1.xpose.msra.mxu0 0.0
  %467 = vmatprep.subr.mxu0 0.0
  %468 = vmatpush1.xpose.msra.mxu0 0.0
  %469 = vmatprep.subr.mxu0 0.0
  %470 = vmatpush1.xpose.msra.mxu0 0.0
  %471 = vmatprep.subr.mxu0 0.0
  %472 = vmatpush1.xpose.msra.mxu0 0.0
  %473 = vmatprep.subr.mxu0 0.0
  %474 = vmatpush1.xpose.msra.mxu0 0.0
  %475 = vmatprep.subr.mxu0 0.0
  %476 = vmatpush1.xpose.msra.mxu0 0.0
  %477 = vmatprep.subr.mxu0 0.0
  %478 = vmatpush1.xpose.msra.mxu0 0.0
  %479 = vmatprep.subr.mxu0 0.0
  %480 = vmatpush1.xpose.msra.mxu0 0.0
  %481 = vmatprep.subr.mxu0 0.0
  %482 = vmatpush1.xpose.msra.mxu0 0.0
  %483 = vmatprep.mubr.f32.mxu0 0.0
  %484 = vmatmul.mubr.f32.gmra.mrb[0].mxu0 %v411
  %v485 = vpop.f32.mrb[0].mxu0
  %v486 = vadd.f32 0.0, %v485
  %v487 = vpop.f32.mrb[0].mxu0
  %488 = vdwg.mxu0
  %v489 = vsel %vm29, %v486, -inf
  %490 = vmax.xlane.f32.xlu0 %v489
  %v491 = vpop.xlane.xlu0 %490
  %v492 = vsub.f32 %v486, %v491
  %v493 = vmul.f32 %v492, 1.442695
  %v494 = vpow.pop %v493
  %v495 = vsel %vm29, %v494, 0.0
  %496 = vadd.xlane.f32.xlu0 %v495
  %v497 = vpop.xlane.xlu0 %496
  %v498 = vrcp.pop %v497
  %v499 = vmul.f32 %v494, %v498
  %500 = vxpose.xlu0.b32.start [1/16] %v499, 128
  %501 = vxpose.xlu0.b32.cont [2/16] 0.0, 128
  %502 = vxpose.xlu0.b32.cont [3/16] 0.0, 128
  %503 = vxpose.xlu0.b32.cont [4/16] 0.0, 128
  %504 = vxpose.xlu0.b32.cont [5/16] 0.0, 128
  %505 = vxpose.xlu0.b32.cont [6/16] 0.0, 128
  %506 = vxpose.xlu0.b32.cont [7/16] 0.0, 128
  %507 = vxpose.xlu0.b32.cont [8/16] 0.0, 128
  %508 = vxpose.xlu0.b32.cont [9/16] 0.0, 128
  %509 = vxpose.xlu0.b32.cont [10/16] 0.0, 128
  %510 = vxpose.xlu0.b32.cont [11/16] 0.0, 128
  %511 = vxpose.xlu0.b32.cont [12/16] 0.0, 128
  %512 = vxpose.xlu0.b32.cont [13/16] 0.0, 128
  %513 = vxpose.xlu0.b32.cont [14/16] 0.0, 128
  %514 = vxpose.xlu0.b32.cont [15/16] 0.0, 128
  %515 = vxpose.xlu0.b32.end [16/16] 0.0, 128
  %v516 = vpop.trf.xlu0
  %v517 = vpop.trf.xlu0
  %v518 = vpop.trf.xlu0
  %v519 = vpop.trf.xlu0
  %v520 = vpop.trf.xlu0
  %v521 = vpop.trf.xlu0
  %v522 = vpop.trf.xlu0
  %v523 = vpop.trf.xlu0
  %v524 = vpop.trf.xlu0
  %v525 = vpop.trf.xlu0
  %v526 = vpop.trf.xlu0
  %v527 = vpop.trf.xlu0
  %v528 = vpop.trf.xlu0
  %v529 = vpop.trf.xlu0
  %v530 = vpop.trf.xlu0
  %v531 = vpop.trf.xlu0
  %v533 = vsel %vm157, %v516, 0
  %v536 = vsel %vm157, %v517, 0
  %538 = vmatprep.subr.mxu0 0.0
  %539 = vmatpush1.msra.mxu0 %v499
  %540 = vmatprep.subr.mxu0 0.0
  %541 = vmatpush1.msra.mxu0 0.0
  %542 = vmatprep.subr.mxu0 0.0
  %543 = vmatpush1.msra.mxu0 0.0
  %544 = vmatprep.subr.mxu0 0.0
  %545 = vmatpush1.msra.mxu0 0.0
  %546 = vmatprep.subr.mxu0 0.0
  %547 = vmatpush1.msra.mxu0 0.0
  %548 = vmatprep.subr.mxu0 0.0
  %549 = vmatpush1.msra.mxu0 0.0
  %550 = vmatprep.subr.mxu0 0.0
  %551 = vmatpush1.msra.mxu0 0.0
  %552 = vmatprep.subr.mxu0 0.0
  %553 = vmatpush1.msra.mxu0 0.0
  %554 = vmatprep.subr.mxu0 0.0
  %555 = vmatpush1.msra.mxu0 0.0
  %556 = vmatprep.subr.mxu0 0.0
  %557 = vmatpush1.msra.mxu0 0.0
  %558 = vmatprep.subr.mxu0 0.0
  %559 = vmatpush1.msra.mxu0 0.0
  %560 = vmatprep.subr.mxu0 0.0
  %561 = vmatpush1.msra.mxu0 0.0
  %562 = vmatprep.subr.mxu0 0.0
  %563 = vmatpush1.msra.mxu0 0.0
  %564 = vmatprep.subr.mxu0 0.0
  %565 = vmatpush1.msra.mxu0 0.0
  %566 = vmatprep.subr.mxu0 0.0
  %567 = vmatpush1.msra.mxu0 0.0
  %568 = vmatprep.subr.mxu0 0.0
  %569 = vmatpush1.msra.mxu0 0.0
  %570 = vmatprep.subr.mxu0 0.0
  %571 = vmatpush1.msra.mxu0 0.0
  %572 = vmatprep.subr.mxu0 0.0
  %573 = vmatpush1.msra.mxu0 0.0
  %574 = vmatprep.subr.mxu0 0.0
  %575 = vmatpush1.msra.mxu0 0.0
  %576 = vmatprep.subr.mxu0 0.0
  %577 = vmatpush1.msra.mxu0 0.0
  %578 = vmatprep.subr.mxu0 0.0
  %579 = vmatpush1.msra.mxu0 0.0
  %580 = vmatprep.subr.mxu0 0.0
  %581 = vmatpush1.msra.mxu0 0.0
  %582 = vmatprep.subr.mxu0 0.0
  %583 = vmatpush1.msra.mxu0 0.0
  %584 = vmatprep.subr.mxu0 0.0
  %585 = vmatpush1.msra.mxu0 0.0
  %586 = vmatprep.subr.mxu0 0.0
  %587 = vmatpush1.msra.mxu0 0.0
  %588 = vmatprep.subr.mxu0 0.0
  %589 = vmatpush1.msra.mxu0 0.0
  %590 = vmatprep.subr.mxu0 0.0
  %591 = vmatpush1.msra.mxu0 0.0
  %592 = vmatprep.subr.mxu0 0.0
  %593 = vmatpush1.msra.mxu0 0.0
  %594 = vmatprep.subr.mxu0 0.0
  %595 = vmatpush1.msra.mxu0 0.0
  %596 = vmatprep.subr.mxu0 0.0
  %597 = vmatpush1.msra.mxu0 0.0
  %598 = vmatprep.subr.mxu0 0.0
  %599 = vmatpush1.msra.mxu0 0.0
  %600 = vmatprep.subr.mxu0 0.0
  %601 = vmatpush1.msra.mxu0 0.0
  %602 = vmatprep.mubr.f32.mxu0 0.0
  %603 = vmatmul.mubr.f32.gmra.mrb[0].mxu0 %v533
  %v604 = vpop.f32.mrb[0].mxu0
  %v605 = vadd.f32 0.0, %v604
  %v606 = vpop.f32.mrb[0].mxu0
  %607 = vmatprep.mubr.f32.mxu0 0.0
  %608 = vmatmul.mubr.f32.gmra.mrb[0].mxu0 %v536
  %v609 = vpop.f32.mrb[0].mxu0
  %v610 = vadd.f32 0.0, %v609
  %v611 = vpop.f32.mrb[0].mxu0
  %612 = vdwg.mxu0
  %v614 = vsel %vm29, %v605, 0
  %v617 = vsel %vm29, %v610, 0
  %619 = vmatprep.subr.mxu0 0.0
  %620 = vmatpush1.msra.mxu0 %v406
  %621 = vmatprep.subr.mxu0 0.0
  %622 = vmatpush1.msra.mxu0 %v407
  %623 = vmatprep.subr.mxu0 0.0
  %624 = vmatpush1.msra.mxu0 0.0
  %625 = vmatprep.subr.mxu0 0.0
  %626 = vmatpush1.msra.mxu0 0.0
  %627 = vmatprep.subr.mxu0 0.0
  %628 = vmatpush1.msra.mxu0 0.0
  %629 = vmatprep.subr.mxu0 0.0
  %630 = vmatpush1.msra.mxu0 0.0
  %631 = vmatprep.subr.mxu0 0.0
  %632 = vmatpush1.msra.mxu0 0.0
  %633 = vmatprep.subr.mxu0 0.0
  %634 = vmatpush1.msra.mxu0 0.0
  %635 = vmatprep.subr.mxu0 0.0
  %636 = vmatpush1.msra.mxu0 0.0
  %637 = vmatprep.subr.mxu0 0.0
  %638 = vmatpush1.msra.mxu0 0.0
  %639 = vmatprep.subr.mxu0 0.0
  %640 = vmatpush1.msra.mxu0 0.0
  %641 = vmatprep.subr.mxu0 0.0
  %642 = vmatpush1.msra.mxu0 0.0
  %643 = vmatprep.subr.mxu0 0.0
  %644 = vmatpush1.msra.mxu0 0.0
  %645 = vmatprep.subr.mxu0 0.0
  %646 = vmatpush1.msra.mxu0 0.0
  %647 = vmatprep.subr.mxu0 0.0
  %648 = vmatpush1.msra.mxu0 0.0
  %649 = vmatprep.subr.mxu0 0.0
  %650 = vmatpush1.msra.mxu0 0.0
  %651 = vmatprep.subr.mxu0 0.0
  %652 = vmatpush1.msra.mxu0 0.0
  %653 = vmatprep.subr.mxu0 0.0
  %654 = vmatpush1.msra.mxu0 0.0
  %655 = vmatprep.subr.mxu0 0.0
  %656 = vmatpush1.msra.mxu0 0.0
  %657 = vmatprep.subr.mxu0 0.0
  %658 = vmatpush1.msra.mxu0 0.0
  %659 = vmatprep.subr.mxu0 0.0
  %660 = vmatpush1.msra.mxu0 0.0
  %661 = vmatprep.subr.mxu0 0.0
  %662 = vmatpush1.msra.mxu0 0.0
  %663 = vmatprep.subr.mxu0 0.0
  %664 = vmatpush1.msra.mxu0 0.0
  %665 = vmatprep.subr.mxu0 0.0
  %666 = vmatpush1.msra.mxu0 0.0
  %667 = vmatprep.subr.mxu0 0.0
  %668 = vmatpush1.msra.mxu0 0.0
  %669 = vmatprep.subr.mxu0 0.0
  %670 = vmatpush1.msra.mxu0 0.0
  %671 = vmatprep.subr.mxu0 0.0
  %672 = vmatpush1.msra.mxu0 0.0
  %673 = vmatprep.subr.mxu0 0.0
  %674 = vmatpush1.msra.mxu0 0.0
  %675 = vmatprep.subr.mxu0 0.0
  %676 = vmatpush1.msra.mxu0 0.0
  %677 = vmatprep.subr.mxu0 0.0
  %678 = vmatpush1.msra.mxu0 0.0
  %679 = vmatprep.subr.mxu0 0.0
  %680 = vmatpush1.msra.mxu0 0.0
  %681 = vmatprep.subr.mxu0 0.0
  %682 = vmatpush1.msra.mxu0 0.0
  %683 = vmatprep.mubr.f32.mxu0 0.0
  %684 = vmatmul.mubr.f32.gmra.mrb[0].mxu0 %v614
  %v685 = vpop.f32.mrb[0].mxu0
  %v686 = vadd.f32 0.0, %v685
  %v687 = vpop.f32.mrb[0].mxu0
  %688 = vmatprep.mubr.f32.mxu0 0.0
  %689 = vmatmul.mubr.f32.gmra.mrb[0].mxu0 %v617
  %v690 = vpop.f32.mrb[0].mxu0
  %v691 = vadd.f32 0.0, %v690
  %v692 = vpop.f32.mrb[0].mxu0
  %693 = vdwg.mxu0
  %694 = vmatprep.subr.mxu0 0.0
  %695 = vmatpush1.msra.mxu0 %v14
  %696 = vmatprep.subr.mxu0 0.0
  %697 = vmatpush1.msra.mxu0 %v15
  %698 = vmatprep.subr.mxu0 0.0
  %699 = vmatpush1.msra.mxu0 0.0
  %700 = vmatprep.subr.mxu0 0.0
  %701 = vmatpush1.msra.mxu0 0.0
  %702 = vmatprep.subr.mxu0 0.0
  %703 = vmatpush1.msra.mxu0 0.0
  %704 = vmatprep.subr.mxu0 0.0
  %705 = vmatpush1.msra.mxu0 0.0
  %706 = vmatprep.subr.mxu0 0.0
  %707 = vmatpush1.msra.mxu0 0.0
  %708 = vmatprep.subr.mxu0 0.0
  %709 = vmatpush1.msra.mxu0 0.0
  %710 = vmatprep.subr.mxu0 0.0
  %711 = vmatpush1.msra.mxu0 0.0
  %712 = vmatprep.subr.mxu0 0.0
  %713 = vmatpush1.msra.mxu0 0.0
  %714 = vmatprep.subr.mxu0 0.0
  %715 = vmatpush1.msra.mxu0 0.0
  %716 = vmatprep.subr.mxu0 0.0
  %717 = vmatpush1.msra.mxu0 0.0
  %718 = vmatprep.subr.mxu0 0.0
  %719 = vmatpush1.msra.mxu0 0.0
  %720 = vmatprep.subr.mxu0 0.0
  %721 = vmatpush1.msra.mxu0 0.0
  %722 = vmatprep.subr.mxu0 0.0
  %723 = vmatpush1.msra.mxu0 0.0
  %724 = vmatprep.subr.mxu0 0.0
  %725 = vmatpush1.msra.mxu0 0.0
  %726 = vmatprep.subr.mxu0 0.0
  %727 = vmatpush1.msra.mxu0 0.0
  %728 = vmatprep.subr.mxu0 0.0
  %729 = vmatpush1.msra.mxu0 0.0
  %730 = vmatprep.subr.mxu0 0.0
  %731 = vmatpush1.msra.mxu0 0.0
  %732 = vmatprep.subr.mxu0 0.0
  %733 = vmatpush1.msra.mxu0 0.0
  %734 = vmatprep.subr.mxu0 0.0
  %735 = vmatpush1.msra.mxu0 0.0
  %736 = vmatprep.subr.mxu0 0.0
  %737 = vmatpush1.msra.mxu0 0.0
  %738 = vmatprep.subr.mxu0 0.0
  %739 = vmatpush1.msra.mxu0 0.0
  %740 = vmatprep.subr.mxu0 0.0
  %741 = vmatpush1.msra.mxu0 0.0
  %742 = vmatprep.subr.mxu0 0.0
  %743 = vmatpush1.msra.mxu0 0.0
  %744 = vmatprep.subr.mxu0 0.0
  %745 = vmatpush1.msra.mxu0 0.0
  %746 = vmatprep.subr.mxu0 0.0
  %747 = vmatpush1.msra.mxu0 0.0
  %748 = vmatprep.subr.mxu0 0.0
  %749 = vmatpush1.msra.mxu0 0.0
  %750 = vmatprep.subr.mxu0 0.0
  %751 = vmatpush1.msra.mxu0 0.0
  %752 = vmatprep.subr.mxu0 0.0
  %753 = vmatpush1.msra.mxu0 0.0
  %754 = vmatprep.subr.mxu0 0.0
  %755 = vmatpush1.msra.mxu0 0.0
  %756 = vmatprep.subr.mxu0 0.0
  %757 = vmatpush1.msra.mxu0 0.0
  %758 = vmatprep.mubr.f32.mxu0 0.0
  %759 = vmatmul.mubr.f32.gmra.mrb[0].mxu0 %v614
  %v760 = vpop.f32.mrb[0].mxu0
  %v761 = vadd.f32 0.0, %v760
  %v762 = vpop.f32.mrb[0].mxu0
  %763 = vmatprep.mubr.f32.mxu0 0.0
  %764 = vmatmul.mubr.f32.gmra.mrb[0].mxu0 %v617
  %v765 = vpop.f32.mrb[0].mxu0
  %v766 = vadd.f32 0.0, %v765
  %v767 = vpop.f32.mrb[0].mxu0
  %768 = vdwg.mxu0
  %v770 = vsel %vm29, %v761, 0
  %v773 = vsel %vm29, %v766, 0
  %775 = vmatprep.subr.mxu0 0.0
  %776 = vmatpush1.msra.mxu0 %v605
  %777 = vmatprep.subr.mxu0 0.0
  %778 = vmatpush1.msra.mxu0 %v610
  %779 = vmatprep.subr.mxu0 0.0
  %780 = vmatpush1.msra.mxu0 0.0
  %781 = vmatprep.subr.mxu0 0.0
  %782 = vmatpush1.msra.mxu0 0.0
  %783 = vmatprep.subr.mxu0 0.0
  %784 = vmatpush1.msra.mxu0 0.0
  %785 = vmatprep.subr.mxu0 0.0
  %786 = vmatpush1.msra.mxu0 0.0
  %787 = vmatprep.subr.mxu0 0.0
  %788 = vmatpush1.msra.mxu0 0.0
  %789 = vmatprep.subr.mxu0 0.0
  %790 = vmatpush1.msra.mxu0 0.0
  %791 = vmatprep.subr.mxu0 0.0
  %792 = vmatpush1.msra.mxu0 0.0
  %793 = vmatprep.subr.mxu0 0.0
  %794 = vmatpush1.msra.mxu0 0.0
  %795 = vmatprep.subr.mxu0 0.0
  %796 = vmatpush1.msra.mxu0 0.0
  %797 = vmatprep.subr.mxu0 0.0
  %798 = vmatpush1.msra.mxu0 0.0
  %799 = vmatprep.subr.mxu0 0.0
  %800 = vmatpush1.msra.mxu0 0.0
  %801 = vmatprep.subr.mxu0 0.0
  %802 = vmatpush1.msra.mxu0 0.0
  %803 = vmatprep.subr.mxu0 0.0
  %804 = vmatpush1.msra.mxu0 0.0
  %805 = vmatprep.subr.mxu0 0.0
  %806 = vmatpush1.msra.mxu0 0.0
  %807 = vmatprep.subr.mxu0 0.0
  %808 = vmatpush1.msra.mxu0 0.0
  %809 = vmatprep.subr.mxu0 0.0
  %810 = vmatpush1.msra.mxu0 0.0
  %811 = vmatprep.subr.mxu0 0.0
  %812 = vmatpush1.msra.mxu0 0.0
  %813 = vmatprep.subr.mxu0 0.0
  %814 = vmatpush1.msra.mxu0 0.0
  %815 = vmatprep.subr.mxu0 0.0
  %816 = vmatpush1.msra.mxu0 0.0
  %817 = vmatprep.subr.mxu0 0.0
  %818 = vmatpush1.msra.mxu0 0.0
  %819 = vmatprep.subr.mxu0 0.0
  %820 = vmatpush1.msra.mxu0 0.0
  %821 = vmatprep.subr.mxu0 0.0
  %822 = vmatpush1.msra.mxu0 0.0
  %823 = vmatprep.subr.mxu0 0.0
  %824 = vmatpush1.msra.mxu0 0.0
  %825 = vmatprep.subr.mxu0 0.0
  %826 = vmatpush1.msra.mxu0 0.0
  %827 = vmatprep.subr.mxu0 0.0
  %828 = vmatpush1.msra.mxu0 0.0
  %829 = vmatprep.subr.mxu0 0.0
  %830 = vmatpush1.msra.mxu0 0.0
  %831 = vmatprep.subr.mxu0 0.0
  %832 = vmatpush1.msra.mxu0 0.0
  %833 = vmatprep.subr.mxu0 0.0
  %834 = vmatpush1.msra.mxu0 0.0
  %835 = vmatprep.subr.mxu0 0.0
  %836 = vmatpush1.msra.mxu0 0.0
  %837 = vmatprep.subr.mxu0 0.0
  %838 = vmatpush1.msra.mxu0 0.0
  %839 = vmatprep.mubr.f32.mxu0 0.0
  %840 = vmatmul.mubr.f32.gmra.mrb[0].mxu0 %v770
  %v841 = vpop.f32.mrb[0].mxu0
  %v842 = vadd.f32 0.0, %v841
  %v843 = vpop.f32.mrb[0].mxu0
  %844 = vmatprep.mubr.f32.mxu0 0.0
  %845 = vmatmul.mubr.f32.gmra.mrb[0].mxu0 %v773
  %v846 = vpop.f32.mrb[0].mxu0
  %v847 = vadd.f32 0.0, %v846
  %v848 = vpop.f32.mrb[0].mxu0
  %849 = vdwg.mxu0
  %854 = vrot.lane.b32.xlu0 %v56, 96
  %v855 = vpop.permute.xlu0 %854
  %856 = vrot.lane.b32.xlu0 %v57, 96
  %v857 = vpop.permute.xlu0 %856
  %858 = vrot.lane.b32.xlu0 %v58, 96
  %v859 = vpop.permute.xlu0 %858
  %860 = vrot.lane.b32.xlu0 %v59, 96
  %v861 = vpop.permute.xlu0 %860
  %v867 = vsel %vm241, %v686, 0
  %v870 = vsel %vm241, %v691, 0
  %872 = vmatprep.subr.mxu0 0.0
  %873 = vmatpush1.msra.mxu0 %v855
  %874 = vmatprep.subr.mxu0 0.0
  %875 = vmatpush1.msra.mxu0 %v857
  %876 = vmatprep.subr.mxu0 0.0
  %877 = vmatpush1.msra.mxu0 %v859
  %878 = vmatprep.subr.mxu0 0.0
  %879 = vmatpush1.msra.mxu0 %v861
  %880 = vmatprep.subr.mxu0 0.0
  %881 = vmatpush1.msra.mxu0 0.0
  %882 = vmatprep.subr.mxu0 0.0
  %883 = vmatpush1.msra.mxu0 0.0
  %884 = vmatprep.subr.mxu0 0.0
  %885 = vmatpush1.msra.mxu0 0.0
  %886 = vmatprep.subr.mxu0 0.0
  %887 = vmatpush1.msra.mxu0 0.0
  %888 = vmatprep.subr.mxu0 0.0
  %889 = vmatpush1.msra.mxu0 0.0
  %890 = vmatprep.subr.mxu0 0.0
  %891 = vmatpush1.msra.mxu0 0.0
  %892 = vmatprep.subr.mxu0 0.0
  %893 = vmatpush1.msra.mxu0 0.0
  %894 = vmatprep.subr.mxu0 0.0
  %895 = vmatpush1.msra.mxu0 0.0
  %896 = vmatprep.subr.mxu0 0.0
  %897 = vmatpush1.msra.mxu0 0.0
  %898 = vmatprep.subr.mxu0 0.0
  %899 = vmatpush1.msra.mxu0 0.0
  %900 = vmatprep.subr.mxu0 0.0
  %901 = vmatpush1.msra.mxu0 0.0
  %902 = vmatprep.subr.mxu0 0.0
  %903 = vmatpush1.msra.mxu0 0.0
  %904 = vmatprep.subr.mxu0 0.0
  %905 = vmatpush1.msra.mxu0 0.0
  %906 = vmatprep.subr.mxu0 0.0
  %907 = vmatpush1.msra.mxu0 0.0
  %908 = vmatprep.subr.mxu0 0.0
  %909 = vmatpush1.msra.mxu0 0.0
  %910 = vmatprep.subr.mxu0 0.0
  %911 = vmatpush1.msra.mxu0 0.0
  %912 = vmatprep.subr.mxu0 0.0
  %913 = vmatpush1.msra.mxu0 0.0
  %914 = vmatprep.subr.mxu0 0.0
  %915 = vmatpush1.msra.mxu0 0.0
  %916 = vmatprep.subr.mxu0 0.0
  %917 = vmatpush1.msra.mxu0 0.0
  %918 = vmatprep.subr.mxu0 0.0
  %919 = vmatpush1.msra.mxu0 0.0
  %920 = vmatprep.subr.mxu0 0.0
  %921 = vmatpush1.msra.mxu0 0.0
  %922 = vmatprep.subr.mxu0 0.0
  %923 = vmatpush1.msra.mxu0 0.0
  %924 = vmatprep.subr.mxu0 0.0
  %925 = vmatpush1.msra.mxu0 0.0
  %926 = vmatprep.subr.mxu0 0.0
  %927 = vmatpush1.msra.mxu0 0.0
  %928 = vmatprep.subr.mxu0 0.0
  %929 = vmatpush1.msra.mxu0 0.0
  %930 = vmatprep.subr.mxu0 0.0
  %931 = vmatpush1.msra.mxu0 0.0
  %932 = vmatprep.subr.mxu0 0.0
  %933 = vmatpush1.msra.mxu0 0.0
  %934 = vmatprep.subr.mxu0 0.0
  %935 = vmatpush1.msra.mxu0 0.0
  %936 = vmatprep.mubr.f32.mxu0 0.0
  %937 = vmatmul.mubr.f32.gmra.mrb[0].mxu0 %v867
  %v938 = vpop.f32.mrb[0].mxu0
  %v939 = vadd.f32 0.0, %v938
  %v940 = vpop.f32.mrb[0].mxu0
  %941 = vmatprep.mubr.f32.mxu0 0.0
  %942 = vmatmul.mubr.f32.gmra.mrb[0].mxu0 %v870
  %v943 = vpop.f32.mrb[0].mxu0
  %v944 = vadd.f32 0.0, %v943
  %v945 = vpop.f32.mrb[0].mxu0
  %946 = vdwg.mxu0
  %v947 = vlaneseq
  %v948 = vshrl.u32 %v947, 7
  %v949 = vsub.s32 0, %v948
  %v950 = vrot.slane %v63, %v949
  %952 = vrot.lane.b32.xlu0 %v950, 64
  %v953 = vpop.permute.xlu0 %952
  %955 = vmatprep.subr.mxu0 0.0
  %956 = vmatpush1.msra.mxu0 %v939
  %957 = vmatprep.subr.mxu0 0.0
  %958 = vmatpush1.msra.mxu0 %v944
  %959 = vmatprep.subr.mxu0 0.0
  %960 = vmatpush1.msra.mxu0 0.0
  %961 = vmatprep.subr.mxu0 0.0
  %962 = vmatpush1.msra.mxu0 0.0
  %963 = vmatprep.subr.mxu0 0.0
  %964 = vmatpush1.msra.mxu0 0.0
  %965 = vmatprep.subr.mxu0 0.0
  %966 = vmatpush1.msra.mxu0 0.0
  %967 = vmatprep.subr.mxu0 0.0
  %968 = vmatpush1.msra.mxu0 0.0
  %969 = vmatprep.subr.mxu0 0.0
  %970 = vmatpush1.msra.mxu0 0.0
  %971 = vmatprep.subr.mxu0 0.0
  %972 = vmatpush1.msra.mxu0 0.0
  %973 = vmatprep.subr.mxu0 0.0
  %974 = vmatpush1.msra.mxu0 0.0
  %975 = vmatprep.subr.mxu0 0.0
  %976 = vmatpush1.msra.mxu0 0.0
  %977 = vmatprep.subr.mxu0 0.0
  %978 = vmatpush1.msra.mxu0 0.0
  %979 = vmatprep.subr.mxu0 0.0
  %980 = vmatpush1.msra.mxu0 0.0
  %981 = vmatprep.subr.mxu0 0.0
  %982 = vmatpush1.msra.mxu0 0.0
  %983 = vmatprep.subr.mxu0 0.0
  %984 = vmatpush1.msra.mxu0 0.0
  %985 = vmatprep.subr.mxu0 0.0
  %986 = vmatpush1.msra.mxu0 0.0
  %987 = vmatprep.subr.mxu0 0.0
  %988 = vmatpush1.msra.mxu0 0.0
  %989 = vmatprep.subr.mxu0 0.0
  %990 = vmatpush1.msra.mxu0 0.0
  %991 = vmatprep.subr.mxu0 0.0
  %992 = vmatpush1.msra.mxu0 0.0
  %993 = vmatprep.subr.mxu0 0.0
  %994 = vmatpush1.msra.mxu0 0.0
  %995 = vmatprep.subr.mxu0 0.0
  %996 = vmatpush1.msra.mxu0 0.0
  %997 = vmatprep.subr.mxu0 0.0
  %998 = vmatpush1.msra.mxu0 0.0
  %999 = vmatprep.subr.mxu0 0.0
  %1000 = vmatpush1.msra.mxu0 0.0
  %1001 = vmatprep.subr.mxu0 0.0
  %1002 = vmatpush1.msra.mxu0 0.0
  %1003 = vmatprep.subr.mxu0 0.0
  %1004 = vmatpush1.msra.mxu0 0.0
  %1005 = vmatprep.subr.mxu0 0.0
  %1006 = vmatpush1.msra.mxu0 0.0
  %1007 = vmatprep.subr.mxu0 0.0
  %1008 = vmatpush1.msra.mxu0 0.0
  %1009 = vmatprep.subr.mxu0 0.0
  %1010 = vmatpush1.msra.mxu0 0.0
  %1011 = vmatprep.subr.mxu0 0.0
  %1012 = vmatpush1.msra.mxu0 0.0
  %1013 = vmatprep.subr.mxu0 0.0
  %1014 = vmatpush1.msra.mxu0 0.0
  %1015 = vmatprep.subr.mxu0 0.0
  %1016 = vmatpush1.msra.mxu0 0.0
  %1017 = vmatprep.subr.mxu0 0.0
  %1018 = vmatpush1.msra.mxu0 0.0
  %1019 = vmatprep.mubr.f32.mxu0 0.0
  %1020 = vmatmul.mubr.f32.gmra.mrb[0].mxu0 %v69
  %v1021 = vpop.f32.mrb[0].mxu0
  %v1022 = vadd.f32 %v953, %v1021
  %v1023 = vpop.f32.mrb[0].mxu0
  %1024 = vmatprep.mubr.f32.mxu0 0.0
  %1025 = vmatmul.mubr.f32.gmra.mrb[0].mxu0 %v72
  %v1026 = vpop.f32.mrb[0].mxu0
  %v1027 = vadd.f32 %v953, %v1026
  %v1028 = vpop.f32.mrb[0].mxu0
  %1029 = vdwg.mxu0
  %v1030 = vtanh.pop %v1022
  %v1031 = vtanh.pop %v1027
  %1032 = vrot.lane.b32.xlu0 %v56, 64
  %v1033 = vpop.permute.xlu0 %1032
  %1034 = vrot.lane.b32.xlu0 %v57, 64
  %v1035 = vpop.permute.xlu0 %1034
  %1036 = vrot.lane.b32.xlu0 %v58, 64
  %v1037 = vpop.permute.xlu0 %1036
  %1038 = vrot.lane.b32.xlu0 %v59, 64
  %v1039 = vpop.permute.xlu0 %1038
  %v1045 = vsel %vm241, %v1030, 0
  %v1048 = vsel %vm241, %v1031, 0
  %1050 = vmatprep.subr.mxu0 0.0
  %1051 = vmatpush1.msra.mxu0 %v1033
  %1052 = vmatprep.subr.mxu0 0.0
  %1053 = vmatpush1.msra.mxu0 %v1035
  %1054 = vmatprep.subr.mxu0 0.0
  %1055 = vmatpush1.msra.mxu0 %v1037
  %1056 = vmatprep.subr.mxu0 0.0
  %1057 = vmatpush1.msra.mxu0 %v1039
  %1058 = vmatprep.subr.mxu0 0.0
  %1059 = vmatpush1.msra.mxu0 0.0
  %1060 = vmatprep.subr.mxu0 0.0
  %1061 = vmatpush1.msra.mxu0 0.0
  %1062 = vmatprep.subr.mxu0 0.0
  %1063 = vmatpush1.msra.mxu0 0.0
  %1064 = vmatprep.subr.mxu0 0.0
  %1065 = vmatpush1.msra.mxu0 0.0
  %1066 = vmatprep.subr.mxu0 0.0
  %1067 = vmatpush1.msra.mxu0 0.0
  %1068 = vmatprep.subr.mxu0 0.0
  %1069 = vmatpush1.msra.mxu0 0.0
  %1070 = vmatprep.subr.mxu0 0.0
  %1071 = vmatpush1.msra.mxu0 0.0
  %1072 = vmatprep.subr.mxu0 0.0
  %1073 = vmatpush1.msra.mxu0 0.0
  %1074 = vmatprep.subr.mxu0 0.0
  %1075 = vmatpush1.msra.mxu0 0.0
  %1076 = vmatprep.subr.mxu0 0.0
  %1077 = vmatpush1.msra.mxu0 0.0
  %1078 = vmatprep.subr.mxu0 0.0
  %1079 = vmatpush1.msra.mxu0 0.0
  %1080 = vmatprep.subr.mxu0 0.0
  %1081 = vmatpush1.msra.mxu0 0.0
  %1082 = vmatprep.subr.mxu0 0.0
  %1083 = vmatpush1.msra.mxu0 0.0
  %1084 = vmatprep.subr.mxu0 0.0
  %1085 = vmatpush1.msra.mxu0 0.0
  %1086 = vmatprep.subr.mxu0 0.0
  %1087 = vmatpush1.msra.mxu0 0.0
  %1088 = vmatprep.subr.mxu0 0.0
  %1089 = vmatpush1.msra.mxu0 0.0
  %1090 = vmatprep.subr.mxu0 0.0
  %1091 = vmatpush1.msra.mxu0 0.0
  %1092 = vmatprep.subr.mxu0 0.0
  %1093 = vmatpush1.msra.mxu0 0.0
  %1094 = vmatprep.subr.mxu0 0.0
  %1095 = vmatpush1.msra.mxu0 0.0
  %1096 = vmatprep.subr.mxu0 0.0
  %1097 = vmatpush1.msra.mxu0 0.0
  %1098 = vmatprep.subr.mxu0 0.0
  %1099 = vmatpush1.msra.mxu0 0.0
  %1100 = vmatprep.subr.mxu0 0.0
  %1101 = vmatpush1.msra.mxu0 0.0
  %1102 = vmatprep.subr.mxu0 0.0
  %1103 = vmatpush1.msra.mxu0 0.0
  %1104 = vmatprep.subr.mxu0 0.0
  %1105 = vmatpush1.msra.mxu0 0.0
  %1106 = vmatprep.subr.mxu0 0.0
  %1107 = vmatpush1.msra.mxu0 0.0
  %1108 = vmatprep.subr.mxu0 0.0
  %1109 = vmatpush1.msra.mxu0 0.0
  %1110 = vmatprep.subr.mxu0 0.0
  %1111 = vmatpush1.msra.mxu0 0.0
  %1112 = vmatprep.subr.mxu0 0.0
  %1113 = vmatpush1.msra.mxu0 0.0
  %1114 = vmatprep.mubr.f32.mxu0 0.0
  %1115 = vmatmul.mubr.f32.gmra.mrb[0].mxu0 %v1045
  %v1116 = vpop.f32.mrb[0].mxu0
  %v1117 = vadd.f32 0.0, %v1116
  %v1118 = vpop.f32.mrb[0].mxu0
  %1119 = vmatprep.mubr.f32.mxu0 0.0
  %1120 = vmatmul.mubr.f32.gmra.mrb[0].mxu0 %v1048
  %v1121 = vpop.f32.mrb[0].mxu0
  %v1122 = vadd.f32 0.0, %v1121
  %v1123 = vpop.f32.mrb[0].mxu0
  %1124 = vdwg.mxu0
  %v1125 = vlaneseq
  %v1126 = vshrl.u32 %v1125, 7
  %v1127 = vsub.s32 0, %v1126
  %v1128 = vrot.slane %v64, %v1127
  %1130 = vrot.lane.b32.xlu0 %v1128, 64
  %v1131 = vpop.permute.xlu0 %1130
  %1133 = vmatprep.subr.mxu0 0.0
  %1134 = vmatpush1.msra.mxu0 %v1117
  %1135 = vmatprep.subr.mxu0 0.0
  %1136 = vmatpush1.msra.mxu0 %v1122
  %1137 = vmatprep.subr.mxu0 0.0
  %1138 = vmatpush1.msra.mxu0 0.0
  %1139 = vmatprep.subr.mxu0 0.0
  %1140 = vmatpush1.msra.mxu0 0.0
  %1141 = vmatprep.subr.mxu0 0.0
  %1142 = vmatpush1.msra.mxu0 0.0
  %1143 = vmatprep.subr.mxu0 0.0
  %1144 = vmatpush1.msra.mxu0 0.0
  %1145 = vmatprep.subr.mxu0 0.0
  %1146 = vmatpush1.msra.mxu0 0.0
  %1147 = vmatprep.subr.mxu0 0.0
  %1148 = vmatpush1.msra.mxu0 0.0
  %1149 = vmatprep.subr.mxu0 0.0
  %1150 = vmatpush1.msra.mxu0 0.0
  %1151 = vmatprep.subr.mxu0 0.0
  %1152 = vmatpush1.msra.mxu0 0.0
  %1153 = vmatprep.subr.mxu0 0.0
  %1154 = vmatpush1.msra.mxu0 0.0
  %1155 = vmatprep.subr.mxu0 0.0
  %1156 = vmatpush1.msra.mxu0 0.0
  %1157 = vmatprep.subr.mxu0 0.0
  %1158 = vmatpush1.msra.mxu0 0.0
  %1159 = vmatprep.subr.mxu0 0.0
  %1160 = vmatpush1.msra.mxu0 0.0
  %1161 = vmatprep.subr.mxu0 0.0
  %1162 = vmatpush1.msra.mxu0 0.0
  %1163 = vmatprep.subr.mxu0 0.0
  %1164 = vmatpush1.msra.mxu0 0.0
  %1165 = vmatprep.subr.mxu0 0.0
  %1166 = vmatpush1.msra.mxu0 0.0
  %1167 = vmatprep.subr.mxu0 0.0
  %1168 = vmatpush1.msra.mxu0 0.0
  %1169 = vmatprep.subr.mxu0 0.0
  %1170 = vmatpush1.msra.mxu0 0.0
  %1171 = vmatprep.subr.mxu0 0.0
  %1172 = vmatpush1.msra.mxu0 0.0
  %1173 = vmatprep.subr.mxu0 0.0
  %1174 = vmatpush1.msra.mxu0 0.0
  %1175 = vmatprep.subr.mxu0 0.0
  %1176 = vmatpush1.msra.mxu0 0.0
  %1177 = vmatprep.subr.mxu0 0.0
  %1178 = vmatpush1.msra.mxu0 0.0
  %1179 = vmatprep.subr.mxu0 0.0
  %1180 = vmatpush1.msra.mxu0 0.0
  %1181 = vmatprep.subr.mxu0 0.0
  %1182 = vmatpush1.msra.mxu0 0.0
  %1183 = vmatprep.subr.mxu0 0.0
  %1184 = vmatpush1.msra.mxu0 0.0
  %1185 = vmatprep.subr.mxu0 0.0
  %1186 = vmatpush1.msra.mxu0 0.0
  %1187 = vmatprep.subr.mxu0 0.0
  %1188 = vmatpush1.msra.mxu0 0.0
  %1189 = vmatprep.subr.mxu0 0.0
  %1190 = vmatpush1.msra.mxu0 0.0
  %1191 = vmatprep.subr.mxu0 0.0
  %1192 = vmatpush1.msra.mxu0 0.0
  %1193 = vmatprep.subr.mxu0 0.0
  %1194 = vmatpush1.msra.mxu0 0.0
  %1195 = vmatprep.subr.mxu0 0.0
  %1196 = vmatpush1.msra.mxu0 0.0
  %1197 = vmatprep.mubr.f32.mxu0 0.0
  %1198 = vmatmul.mubr.f32.gmra.mrb[0].mxu0 %v69
  %v1199 = vpop.f32.mrb[0].mxu0
  %v1200 = vadd.f32 %v1131, %v1199
  %v1201 = vpop.f32.mrb[0].mxu0
  %1202 = vmatprep.mubr.f32.mxu0 0.0
  %1203 = vmatmul.mubr.f32.gmra.mrb[0].mxu0 %v72
  %v1204 = vpop.f32.mrb[0].mxu0
  %v1205 = vadd.f32 %v1131, %v1204
  %v1206 = vpop.f32.mrb[0].mxu0
  %1207 = vdwg.mxu0
  %v1208 = vtanh.pop %v1200
  %v1209 = vtanh.pop %v1205
  %1210 = vrot.lane.b32.xlu0 %v56, 32
  %v1211 = vpop.permute.xlu0 %1210
  %1212 = vrot.lane.b32.xlu0 %v57, 32
  %v1213 = vpop.permute.xlu0 %1212
  %1214 = vrot.lane.b32.xlu0 %v58, 32
  %v1215 = vpop.permute.xlu0 %1214
  %1216 = vrot.lane.b32.xlu0 %v59, 32
  %v1217 = vpop.permute.xlu0 %1216
  %v1223 = vsel %vm241, %v1208, 0
  %v1226 = vsel %vm241, %v1209, 0
  %1228 = vmatprep.subr.mxu0 0.0
  %1229 = vmatpush1.msra.mxu0 %v1211
  %1230 = vmatprep.subr.mxu0 0.0
  %1231 = vmatpush1.msra.mxu0 %v1213
  %1232 = vmatprep.subr.mxu0 0.0
  %1233 = vmatpush1.msra.mxu0 %v1215
  %1234 = vmatprep.subr.mxu0 0.0
  %1235 = vmatpush1.msra.mxu0 %v1217
  %1236 = vmatprep.subr.mxu0 0.0
  %1237 = vmatpush1.msra.mxu0 0.0
  %1238 = vmatprep.subr.mxu0 0.0
  %1239 = vmatpush1.msra.mxu0 0.0
  %1240 = vmatprep.subr.mxu0 0.0
  %1241 = vmatpush1.msra.mxu0 0.0
  %1242 = vmatprep.subr.mxu0 0.0
  %1243 = vmatpush1.msra.mxu0 0.0
  %1244 = vmatprep.subr.mxu0 0.0
  %1245 = vmatpush1.msra.mxu0 0.0
  %1246 = vmatprep.subr.mxu0 0.0
  %1247 = vmatpush1.msra.mxu0 0.0
  %1248 = vmatprep.subr.mxu0 0.0
  %1249 = vmatpush1.msra.mxu0 0.0
  %1250 = vmatprep.subr.mxu0 0.0
  %1251 = vmatpush1.msra.mxu0 0.0
  %1252 = vmatprep.subr.mxu0 0.0
  %1253 = vmatpush1.msra.mxu0 0.0
  %1254 = vmatprep.subr.mxu0 0.0
  %1255 = vmatpush1.msra.mxu0 0.0
  %1256 = vmatprep.subr.mxu0 0.0
  %1257 = vmatpush1.msra.mxu0 0.0
  %1258 = vmatprep.subr.mxu0 0.0
  %1259 = vmatpush1.msra.mxu0 0.0
  %1260 = vmatprep.subr.mxu0 0.0
  %1261 = vmatpush1.msra.mxu0 0.0
  %1262 = vmatprep.subr.mxu0 0.0
  %1263 = vmatpush1.msra.mxu0 0.0
  %1264 = vmatprep.subr.mxu0 0.0
  %1265 = vmatpush1.msra.mxu0 0.0
  %1266 = vmatprep.subr.mxu0 0.0
  %1267 = vmatpush1.msra.mxu0 0.0
  %1268 = vmatprep.subr.mxu0 0.0
  %1269 = vmatpush1.msra.mxu0 0.0
  %1270 = vmatprep.subr.mxu0 0.0
  %1271 = vmatpush1.msra.mxu0 0.0
  %1272 = vmatprep.subr.mxu0 0.0
  %1273 = vmatpush1.msra.mxu0 0.0
  %1274 = vmatprep.subr.mxu0 0.0
  %1275 = vmatpush1.msra.mxu0 0.0
  %1276 = vmatprep.subr.mxu0 0.0
  %1277 = vmatpush1.msra.mxu0 0.0
  %1278 = vmatprep.subr.mxu0 0.0
  %1279 = vmatpush1.msra.mxu0 0.0
  %1280 = vmatprep.subr.mxu0 0.0
  %1281 = vmatpush1.msra.mxu0 0.0
  %1282 = vmatprep.subr.mxu0 0.0
  %1283 = vmatpush1.msra.mxu0 0.0
  %1284 = vmatprep.subr.mxu0 0.0
  %1285 = vmatpush1.msra.mxu0 0.0
  %1286 = vmatprep.subr.mxu0 0.0
  %1287 = vmatpush1.msra.mxu0 0.0
  %1288 = vmatprep.subr.mxu0 0.0
  %1289 = vmatpush1.msra.mxu0 0.0
  %1290 = vmatprep.subr.mxu0 0.0
  %1291 = vmatpush1.msra.mxu0 0.0
  %1292 = vmatprep.mubr.f32.mxu0 0.0
  %1293 = vmatmul.mubr.f32.gmra.mrb[0].mxu0 %v1223
  %v1294 = vpop.f32.mrb[0].mxu0
  %v1295 = vadd.f32 0.0, %v1294
  %v1296 = vpop.f32.mrb[0].mxu0
  %1297 = vmatprep.mubr.f32.mxu0 0.0
  %1298 = vmatmul.mubr.f32.gmra.mrb[0].mxu0 %v1226
  %v1299 = vpop.f32.mrb[0].mxu0
  %v1300 = vadd.f32 0.0, %v1299
  %v1301 = vpop.f32.mrb[0].mxu0
  %1302 = vdwg.mxu0
  %v1303 = vlaneseq
  %v1304 = vshrl.u32 %v1303, 7
  %v1305 = vsub.s32 0, %v1304
  %v1306 = vrot.slane %v65, %v1305
  %1308 = vrot.lane.b32.xlu0 %v1306, 32
  %v1309 = vpop.permute.xlu0 %1308
  %1311 = vmatprep.subr.mxu0 0.0
  %1312 = vmatpush1.msra.mxu0 %v1295
  %1313 = vmatprep.subr.mxu0 0.0
  %1314 = vmatpush1.msra.mxu0 %v1300
  %1315 = vmatprep.subr.mxu0 0.0
  %1316 = vmatpush1.msra.mxu0 0.0
  %1317 = vmatprep.subr.mxu0 0.0
  %1318 = vmatpush1.msra.mxu0 0.0
  %1319 = vmatprep.subr.mxu0 0.0
  %1320 = vmatpush1.msra.mxu0 0.0
  %1321 = vmatprep.subr.mxu0 0.0
  %1322 = vmatpush1.msra.mxu0 0.0
  %1323 = vmatprep.subr.mxu0 0.0
  %1324 = vmatpush1.msra.mxu0 0.0
  %1325 = vmatprep.subr.mxu0 0.0
  %1326 = vmatpush1.msra.mxu0 0.0
  %1327 = vmatprep.subr.mxu0 0.0
  %1328 = vmatpush1.msra.mxu0 0.0
  %1329 = vmatprep.subr.mxu0 0.0
  %1330 = vmatpush1.msra.mxu0 0.0
  %1331 = vmatprep.subr.mxu0 0.0
  %1332 = vmatpush1.msra.mxu0 0.0
  %1333 = vmatprep.subr.mxu0 0.0
  %1334 = vmatpush1.msra.mxu0 0.0
  %1335 = vmatprep.subr.mxu0 0.0
  %1336 = vmatpush1.msra.mxu0 0.0
  %1337 = vmatprep.subr.mxu0 0.0
  %1338 = vmatpush1.msra.mxu0 0.0
  %1339 = vmatprep.subr.mxu0 0.0
  %1340 = vmatpush1.msra.mxu0 0.0
  %1341 = vmatprep.subr.mxu0 0.0
  %1342 = vmatpush1.msra.mxu0 0.0
  %1343 = vmatprep.subr.mxu0 0.0
  %1344 = vmatpush1.msra.mxu0 0.0
  %1345 = vmatprep.subr.mxu0 0.0
  %1346 = vmatpush1.msra.mxu0 0.0
  %1347 = vmatprep.subr.mxu0 0.0
  %1348 = vmatpush1.msra.mxu0 0.0
  %1349 = vmatprep.subr.mxu0 0.0
  %1350 = vmatpush1.msra.mxu0 0.0
  %1351 = vmatprep.subr.mxu0 0.0
  %1352 = vmatpush1.msra.mxu0 0.0
  %1353 = vmatprep.subr.mxu0 0.0
  %1354 = vmatpush1.msra.mxu0 0.0
  %1355 = vmatprep.subr.mxu0 0.0
  %1356 = vmatpush1.msra.mxu0 0.0
  %1357 = vmatprep.subr.mxu0 0.0
  %1358 = vmatpush1.msra.mxu0 0.0
  %1359 = vmatprep.subr.mxu0 0.0
  %1360 = vmatpush1.msra.mxu0 0.0
  %1361 = vmatprep.subr.mxu0 0.0
  %1362 = vmatpush1.msra.mxu0 0.0
  %1363 = vmatprep.subr.mxu0 0.0
  %1364 = vmatpush1.msra.mxu0 0.0
  %1365 = vmatprep.subr.mxu0 0.0
  %1366 = vmatpush1.msra.mxu0 0.0
  %1367 = vmatprep.subr.mxu0 0.0
  %1368 = vmatpush1.msra.mxu0 0.0
  %1369 = vmatprep.subr.mxu0 0.0
  %1370 = vmatpush1.msra.mxu0 0.0
  %1371 = vmatprep.subr.mxu0 0.0
  %1372 = vmatpush1.msra.mxu0 0.0
  %1373 = vmatprep.subr.mxu0 0.0
  %1374 = vmatpush1.msra.mxu0 0.0
  %1375 = vmatprep.mubr.f32.mxu0 0.0
  %1376 = vmatmul.mubr.f32.gmra.mrb[0].mxu0 %v69
  %v1377 = vpop.f32.mrb[0].mxu0
  %v1378 = vadd.f32 %v1309, %v1377
  %v1379 = vpop.f32.mrb[0].mxu0
  %1380 = vmatprep.mubr.f32.mxu0 0.0
  %1381 = vmatmul.mubr.f32.gmra.mrb[0].mxu0 %v72
  %v1382 = vpop.f32.mrb[0].mxu0
  %v1383 = vadd.f32 %v1309, %v1382
  %v1384 = vpop.f32.mrb[0].mxu0
  %1385 = vdwg.mxu0
  %1386 = vst.msk [vmem:[%s3] sm:$0xff] %vm157, %v1378
  %1387 = vst.msk [vmem:[%s3 + $0x8] sm:$0xff] %vm157, %v1383
  %1390 = vrot.lane.b32.xlu0 %v842, 8
  %v1391 = vpop.permute.xlu0 %1390
  %1392 = vrot.lane.b32.xlu0 %v847, 8
  %v1393 = vpop.permute.xlu0 %1392
  %vm1396 = vcmask 195648
  %1397 = vst.msk [vmem:[%s3] sm:$0xff] %vm1396, %v1391
  %1398 = vst.msk [vmem:[%s3 + $0x8] sm:$0xff] %vm1396, %v1393
  %vm1399 = vcmask 1047744
  %1400 = vst.msk [vmem:[%s3] sm:$0xff] %vm1399, 0.0
  %1401 = vst.msk [vmem:[%s3 + $0x8] sm:$0xff] %vm1399, 0.0
  // Predicated region
  $region14: #{_forward_jit.1} parent=0 // pred_check
    _
  $region15: #{_forward_jit.1} parent=0 // pred_check_branch
    %1403 = sbr.rel (0) target = $region17
  $region16: #{_forward_jit.1} parent=0 // pred_region
    _
  $region17: #{_forward_jit.1} parent=0 // pred_fallthru
    _
  // Predicated region
  $region18: #{_forward_jit.1} parent=0 // pred_check
    _
  $region19: #{_forward_jit.1} parent=0 // pred_check_branch
    %1405 = sbr.rel (0) target = $region21
  $region20: #{_forward_jit.1} parent=0 // pred_region
    _
  $region21: #{_forward_jit.1} parent=0 // pred_fallthru
    _

</llo_original>
